<compile_context>
chip_gen: v5e
topology: v5e:2x2
jax: 0.10.0
libtpu: 0.0.40
codegen_flags: <defaults>
</compile_context>

<pallas_src>
import functools

import jax
import jax.numpy as jnp
from jax.experimental import pallas as pl
from jax.experimental.pallas import tpu as pltpu

_INF = float("inf")


def _round_up(a, b):
    return -(-a // b) * b


def _sublane_multiple(dtype):
    """Minimal second-minor tile multiple for a dtype (f32:8, bf16:16, i8/bool:32)."""
    bits = jnp.dtype(dtype).itemsize * 8
    return max(8, 256 // bits)


def _tpu_config():
    """Generation-aware (target_slab_elems, vmem_limit_bytes, min_blocks, bf16_ok)."""
    try:
        kind = jax.devices()[0].device_kind.lower()
    except Exception:
        kind = ""
    if "v7" in kind:
        # 64 MiB VMEM / TC, 2 TCs: modest slabs, >= 2 balanced grid blocks.
        return 256 * 1024, 48 * 1024 * 1024, 2, True
    if "v6" in kind:
        # 128 MiB VMEM, 1 TC, bf16 VPU: large slabs, bf16 skeleton path.
        return 768 * 1024, 96 * 1024 * 1024, 1, True
    if "v5" in kind or "v4" in kind:
        # 128 MiB VMEM, 1 TC, no bf16 VPU: large slabs, keep f32.
        return 768 * 1024, 96 * 1024 * 1024, 1, False
    # Unknown hardware: conservative defaults.
    return 128 * 1024, 32 * 1024 * 1024, 1, False


# ---------------------------------------------------------------------------
# In-kernel helpers (operate on a packed 2D slab block).
# ---------------------------------------------------------------------------
def _shift(x, mask, shift, axis, fill):
    """x shifted by `shift` along `axis`; positions where `mask` is False
    (image / padding boundary) get `fill`."""
    rolled = pltpu.roll(x, shift=shift % x.shape[axis], axis=axis)
    return jnp.where(mask, rolled, fill)


def _soft_erode(x, masks):
    m_up, m_down, m_left, m_right = masks
    # -maxpool(-x,(3,1),pad(1,0)) and -maxpool(-x,(1,3),pad(0,1)); +inf outside.
    p1 = jnp.minimum(
        jnp.minimum(_shift(x, m_up, 1, 0, _INF), _shift(x, m_down, -1, 0, _INF)), x)
    p2 = jnp.minimum(
        jnp.minimum(_shift(x, m_left, 1, 1, _INF), _shift(x, m_right, -1, 1, _INF)), x)
    return jnp.minimum(p1, p2)


def _soft_dilate(x, masks):
    m_up, m_down, m_left, m_right = masks
    # maxpool(x,(3,3),pad(1,1)) -- separable, -inf outside.
    m = jnp.maximum(
        jnp.maximum(_shift(x, m_left, 1, 1, -_INF), _shift(x, m_right, -1, 1, -_INF)), x)
    return jnp.maximum(
        jnp.maximum(_shift(m, m_up, 1, 0, -_INF), _shift(m, m_down, -1, 0, -_INF)), m)


def _soft_skel(x, num_iter, masks):
    # Deduplicated: erode(img_k) is reused as img_{k+1} (iter+1 erodes total).
    e = _soft_erode(x, masks)
    skel = jnp.maximum(x - _soft_dilate(e, masks), 0.0)
    img = e
    for _ in range(num_iter):
        e = _soft_erode(img, masks)
        delta = jnp.maximum(img - _soft_dilate(e, masks), 0.0)
        skel = skel + jnp.maximum(delta - skel * delta, 0.0)
        img = e
    return skel


def _cldice_sums_kernel(yt_ref, yp_ref, out_ref, *, num_iter, H, Hp, W,
                        n_lanes, Wp, compute_dtype):
    """One grid step: a (gr*Hp, Wp) block holding gr*CP packed images.
    Writes 7 per-lane partial sums (one per sublane row) into an (8, Wp) tile."""
    # Inputs are DMA'd in native dtype; cast once in VMEM. f32 copies are used
    # for the (exact) dice sums and f32 accumulation of the skeleton sums.
    yt_f = yt_ref[...].astype(jnp.float32)
    yp_f = yp_ref[...].astype(jnp.float32)
    shape = yt_f.shape

    # Hoisted boundary masks (built once per block, reused by every shift).
    rr = jax.lax.broadcasted_iota(jnp.int32, shape, 0) % Hp        # row in image
    ci = jax.lax.broadcasted_iota(jnp.int32, shape, 1)             # lane index
    cc = ci % W                                                    # col in image
    real_lane = ci < n_lanes
    m_up = jnp.logical_and(rr >= 1, rr < H)          # reads row above
    m_down = rr < (H - 1)                            # reads row below
    m_left = jnp.logical_and(cc >= 1, real_lane)     # reads col to the left
    m_right = jnp.logical_and(cc < (W - 1), real_lane)  # reads col to the right
    masks = (m_up, m_down, m_left, m_right)

    # Skeletonization in compute_dtype (bf16 on v6e/v7x, f32 on v5e).
    # min/max/select are exact in bf16; only the skel-update multiply rounds.
    skel_p = _soft_skel(yp_f.astype(compute_dtype), num_iter, masks).astype(jnp.float32)
    skel_t = _soft_skel(yt_f.astype(compute_dtype), num_iter, masks).astype(jnp.float32)

    # Per-lane (sublane-only) partial sums, one quantity per output row.
    def put(k, q):
        out_ref[0, k:k + 1, :] = jnp.sum(q, axis=0, keepdims=True)

    put(0, yt_f * yp_f)      # intersection
    put(1, yt_f)
    put(2, yp_f)
    put(3, skel_p * yt_f)
    put(4, skel_p)
    put(5, skel_t * yp_f)
    put(6, skel_t)
    out_ref[0, 7:8, :] = jnp.zeros((1, Wp), jnp.float32)


# ---------------------------------------------------------------------------
# Wrapper: layout (lane packing), generation-aware tiling, scalar algebra.
# ---------------------------------------------------------------------------
def soft_dice_cldice_loss(y_true, y_pred, *, iter_=3, alpha=0.5, smooth=1.0,
                          exclude_background=False, skeleton_dtype=None):
    if exclude_background and y_true.shape[1] > 1:
        y_true = y_true[:, 1:, :, :]
        y_pred = y_pred[:, 1:, :, :]

    B, C, H, W = y_true.shape
    N = B * C

    target_elems, vmem_limit, min_blocks, bf16_ok = _tpu_config()
    if skeleton_dtype is None:
        skeleton_dtype = jnp.bfloat16 if bf16_ok else jnp.float32

    # --- layout: pack CP images side-by-side along the lane axis -----------
    sub = max(_sublane_multiple(y_true.dtype), _sublane_multiple(y_pred.dtype))
    Hp = _round_up(H, sub)                      # per-image sublane-aligned height

    best = None
    for wp_cand in (128, 256, 384):             # allow CP*W to span multiple vregs
        cp = wp_cand // W
        if cp < 1:
            continue
        occ = (cp * W) / wp_cand
        if best is None or occ > best[0] + 1e-9:
            best = (occ, cp, wp_cand)
    if best is None:                            # W > 384: one image per row-block
        best = (W / _round_up(W, 128), 1, _round_up(W, 128))
    _, CP, Wp = best
    NR = -(-N // CP)                            # row-blocks of CP images each

    # v7x: guarantee >= min_blocks row-blocks so the parallel grid axis splits
    # across both TensorCores (trade some lane packing if necessary).
    if min_blocks > 1 and NR < min_blocks and CP > 1:
        CP = max(1, -(-N // min_blocks))
        NR = -(-N // CP)
        Wp = _round_up(CP * W, 128)
    n_lanes = CP * W

    # --- grid sizing --------------------------------------------------------
    # TODO(synk): split H/W for very large single images (a block currently
    # spans at least one whole image).
    gr = max(1, min(NR, target_elems // (Hp * Wp)))
    if min_blocks > 1:
        gr = max(1, min(gr, -(-NR // min_blocks)))
    NRp = _round_up(NR, gr)
    num_blocks = NRp // gr
    block_rows = gr * Hp

    def to_slab(x):
        x3 = x.reshape(N, H, W)
        pad_n = NRp * CP - N
        pad_h = Hp - H
        if pad_n or pad_h:
            x3 = jnp.pad(x3, ((0, pad_n), (0, pad_h), (0, 0)))
        if CP == 1:
            slab = x3.reshape(NRp * Hp, W)
        else:
            x4 = x3.reshape(NRp, CP, Hp, W).transpose(0, 2, 1, 3)  # (NRp,Hp,CP,W)
            slab = x4.reshape(NRp * Hp, n_lanes)
        pad_l = Wp - n_lanes
        if pad_l:
            slab = jnp.pad(slab, ((0, 0), (0, pad_l)))
        return slab

    # TODO(synk): fuse the pad/transpose into the pallas_call input pipeline
    # (allow_input_fusion) to avoid the extra HBM round-trip when CP > 1.
    yt2 = to_slab(y_true)   # native dtype (no host-side upcast)
    yp2 = to_slab(y_pred)

    kernel = functools.partial(
        _cldice_sums_kernel, num_iter=iter_, H=H, Hp=Hp, W=W,
        n_lanes=n_lanes, Wp=Wp, compute_dtype=jnp.dtype(skeleton_dtype))

    partials = pl.pallas_call(
        kernel,
        out_shape=jax.ShapeDtypeStruct((num_blocks, 8, Wp), jnp.float32),
        grid=(num_blocks,),
        in_specs=[pl.BlockSpec((block_rows, Wp), lambda i: (i, 0)),
                  pl.BlockSpec((block_rows, Wp), lambda i: (i, 0))],
        out_specs=pl.BlockSpec((1, 8, Wp), lambda i: (i, 0, 0)),
        compiler_params=pltpu.CompilerParams(
            dimension_semantics=("parallel",),
            vmem_limit_bytes=vmem_limit),
    )(yt2, yp2)

    # Tiny cross-lane / cross-block reduction + scalar algebra in plain JAX.
    sums = jnp.sum(partials, axis=(0, 2))            # (8,)
    inter, sum_t, sum_p = sums[0], sums[1], sums[2]
    sp_yt, sp, st_yp, st = sums[3], sums[4], sums[5], sums[6]

    dice_loss = 1.0 - (2.0 * inter + smooth) / (sum_t + sum_p + smooth)
    tprec = (sp_yt + smooth) / (sp + smooth)
    tsens = (st_yp + smooth) / (st + smooth)
    cl_dice_loss = 1.0 - 2.0 * (tprec * tsens) / (tprec + tsens + 1e-8)
    return (1.0 - alpha) * dice_loss + alpha * cl_dice_loss


# ---------------------------------------------------------------------------
# Pure-JAX reference (NCHW) for correctness checking.
# ---------------------------------------------------------------------------
def _ref_erode(x):
    xh = jnp.pad(x, ((0, 0), (0, 0), (1, 1), (0, 0)), constant_values=_INF)
    p1 = jnp.minimum(jnp.minimum(xh[:, :, :-2, :], xh[:, :, 1:-1, :]), xh[:, :, 2:, :])
    xw = jnp.pad(x, ((0, 0), (0, 0), (0, 0), (1, 1)), constant_values=_INF)
    p2 = jnp.minimum(jnp.minimum(xw[:, :, :, :-2], xw[:, :, :, 1:-1]), xw[:, :, :, 2:])
    return jnp.minimum(p1, p2)


def _ref_dilate(x):
    H, W = x.shape[2], x.shape[3]
    xp = jnp.pad(x, ((0, 0), (0, 0), (1, 1), (1, 1)), constant_values=-_INF)
    m = None
    for i in range(3):
        for j in range(3):
            w = xp[:, :, i:i + H, j:j + W]
            m = w if m is None else jnp.maximum(m, w)
    return m


def _ref_skel(x, num_iter):
    img = x
    skel = jnp.maximum(img - _ref_dilate(_ref_erode(img)), 0.0)
    for _ in range(num_iter):
        img = _ref_erode(img)
        delta = jnp.maximum(img - _ref_dilate(_ref_erode(img)), 0.0)
        skel = skel + jnp.maximum(delta - skel * delta, 0.0)
    return skel


def _ref_loss(y_true, y_pred, iter_=3, alpha=0.5, smooth=1.0):
    y_true = y_true.astype(jnp.float32)
    y_pred = y_pred.astype(jnp.float32)
    inter = jnp.sum(y_true * y_pred)
    dice = 1.0 - (2.0 * inter + smooth) / (jnp.sum(y_true) + jnp.sum(y_pred) + smooth)
    sp = _ref_skel(y_pred, iter_)
    st = _ref_skel(y_true, iter_)
    tprec = (jnp.sum(sp * y_true) + smooth) / (jnp.sum(sp) + smooth)
    tsens = (jnp.sum(st * y_pred) + smooth) / (jnp.sum(st) + smooth)
    cl = 1.0 - 2.0 * (tprec * tsens) / (tprec + tsens + 1e-8)
    return (1.0 - alpha) * dice + alpha * cl


if __name__ == "__main__":
    key = jax.random.PRNGKey(0)
    k1, k2 = jax.random.split(key)
    B, C, H, W = 2, 4, 16, 16
    y_pred = jax.random.uniform(k1, (B, C, H, W), dtype=jnp.float32)
    y_true = (jax.random.uniform(k2, (B, C, H, W)) > 0.5).astype(jnp.float32)

    ref = jax.block_until_ready(_ref_loss(y_true, y_pred))

    # f32 skeleton path: same math as the reference (tight check).
    loss_f32 = jax.block_until_ready(
        soft_dice_cldice_loss(y_true, y_pred, iter_=3, alpha=0.5, smooth=1.0,
                              skeleton_dtype=jnp.float32))
    assert abs(float(loss_f32) - float(ref)) < 5e-5, (float(loss_f32), float(ref))

    # Generation-aware default path (bf16 skeleton on v6e/v7x, f32 on v5e).
    loss_auto = jax.block_until_ready(
        soft_dice_cldice_loss(y_true, y_pred, iter_=3, alpha=0.5, smooth=1.0))
    assert abs(float(loss_auto) - float(ref)) < 3e-2, (float(loss_auto), float(ref))

    print("KERNEL_OK")
</pallas_src>

<mosaic_0001>
module attributes {stable_mosaic.version = 11 : i64} {
  func.func @_cldice_sums_kernel(%arg0: i32, %arg1: memref<16x128xf32, #tpu.memory_space<vmem>>, %arg2: memref<16x128xf32, #tpu.memory_space<vmem>>, %arg3: memref<1x8x128xf32, #tpu.memory_space<vmem>>) attributes {dimension_semantics = [#tpu.dimension_semantics<parallel>], iteration_bounds = array<i64: 1>, scalar_prefetch = 0 : i64, scratch_operands = 0 : i64, tpu.core_type = #tpu.core_type<tc>, window_params = [{transform_indices = @transform_0, window_bounds = array<i64: 16, 128>}, {transform_indices = @transform_1, window_bounds = array<i64: 16, 128>}, {transform_indices = @transform_2, window_bounds = array<i64: 1, 8, 128>}]} {
    %c0 = arith.constant 0 : index
    %c0_0 = arith.constant 0 : index
    %0 = vector.load %arg1[%c0, %c0_0] : memref<16x128xf32, #tpu.memory_space<vmem>>, vector<16x128xf32>
    %c0_1 = arith.constant 0 : index
    %c0_2 = arith.constant 0 : index
    %1 = vector.load %arg2[%c0_1, %c0_2] : memref<16x128xf32, #tpu.memory_space<vmem>>, vector<16x128xf32>
    %2 = tpu.iota {dimensions = array<i32: 0>} : vector<16x128xi32>
    %c16_i32 = arith.constant 16 : i32
    %c0_i32 = arith.constant 0 : i32
    %3 = arith.cmpi eq, %c16_i32, %c0_i32 : i32
    %c1_i32 = arith.constant 1 : i32
    %4 = arith.select %3, %c1_i32, %c16_i32 : i32
    %5 = vector.broadcast %4 : i32 to vector<16x128xi32>
    %6 = arith.remsi %2, %5 : vector<16x128xi32>
    %c0_i32_3 = arith.constant 0 : i32
    %7 = vector.broadcast %c0_i32_3 : i32 to vector<16x128xi32>
    %8 = arith.cmpi ne, %6, %7 : vector<16x128xi32>
    %c0_i32_4 = arith.constant 0 : i32
    %9 = vector.broadcast %c0_i32_4 : i32 to vector<16x128xi32>
    %10 = arith.cmpi slt, %6, %9 : vector<16x128xi32>
    %c0_i32_5 = arith.constant 0 : i32
    %11 = arith.cmpi slt, %4, %c0_i32_5 : i32
    %12 = vector.broadcast %11 : i1 to vector<16x128xi1>
    %13 = vector.broadcast %12 : vector<16x128xi1> to vector<16x128xi1>
    %14 = arith.xori %10, %13 : vector<16x128xi1>
    %15 = arith.andi %14, %8 : vector<16x128xi1>
    %16 = vector.broadcast %4 : i32 to vector<16x128xi32>
    %17 = arith.addi %6, %16 : vector<16x128xi32>
    %18 = arith.select %15, %17, %6 : vector<16x128xi1>, vector<16x128xi32>
    %19 = tpu.iota {dimensions = array<i32: 1>} : vector<16x128xi32>
    %c16_i32_6 = arith.constant 16 : i32
    %c0_i32_7 = arith.constant 0 : i32
    %20 = arith.cmpi eq, %c16_i32_6, %c0_i32_7 : i32
    %c1_i32_8 = arith.constant 1 : i32
    %21 = arith.select %20, %c1_i32_8, %c16_i32_6 : i32
    %22 = vector.broadcast %21 : i32 to vector<16x128xi32>
    %23 = arith.remsi %19, %22 : vector<16x128xi32>
    %c0_i32_9 = arith.constant 0 : i32
    %24 = vector.broadcast %c0_i32_9 : i32 to vector<16x128xi32>
    %25 = arith.cmpi ne, %23, %24 : vector<16x128xi32>
    %c0_i32_10 = arith.constant 0 : i32
    %26 = vector.broadcast %c0_i32_10 : i32 to vector<16x128xi32>
    %27 = arith.cmpi slt, %23, %26 : vector<16x128xi32>
    %c0_i32_11 = arith.constant 0 : i32
    %28 = arith.cmpi slt, %21, %c0_i32_11 : i32
    %29 = vector.broadcast %28 : i1 to vector<16x128xi1>
    %30 = vector.broadcast %29 : vector<16x128xi1> to vector<16x128xi1>
    %31 = arith.xori %27, %30 : vector<16x128xi1>
    %32 = arith.andi %31, %25 : vector<16x128xi1>
    %33 = vector.broadcast %21 : i32 to vector<16x128xi32>
    %34 = arith.addi %23, %33 : vector<16x128xi32>
    %35 = arith.select %32, %34, %23 : vector<16x128xi1>, vector<16x128xi32>
    %c128_i32 = arith.constant 128 : i32
    %36 = vector.broadcast %c128_i32 : i32 to vector<16x128xi32>
    %37 = arith.cmpi slt, %19, %36 : vector<16x128xi32>
    %c1_i32_12 = arith.constant 1 : i32
    %38 = vector.broadcast %c1_i32_12 : i32 to vector<16x128xi32>
    %39 = arith.cmpi sge, %18, %38 : vector<16x128xi32>
    %c16_i32_13 = arith.constant 16 : i32
    %40 = vector.broadcast %c16_i32_13 : i32 to vector<16x128xi32>
    %41 = arith.cmpi slt, %18, %40 : vector<16x128xi32>
    %42 = arith.andi %39, %41 : vector<16x128xi1>
    %c15_i32 = arith.constant 15 : i32
    %43 = vector.broadcast %c15_i32 : i32 to vector<16x128xi32>
    %44 = arith.cmpi slt, %18, %43 : vector<16x128xi32>
    %c1_i32_14 = arith.constant 1 : i32
    %45 = vector.broadcast %c1_i32_14 : i32 to vector<16x128xi32>
    %46 = arith.cmpi sge, %35, %45 : vector<16x128xi32>
    %47 = arith.andi %46, %37 : vector<16x128xi1>
    %c15_i32_15 = arith.constant 15 : i32
    %48 = vector.broadcast %c15_i32_15 : i32 to vector<16x128xi32>
    %49 = arith.cmpi slt, %35, %48 : vector<16x128xi32>
    %50 = arith.andi %49, %37 : vector<16x128xi1>
    %c1_i32_16 = arith.constant 1 : i32
    %51 = tpu.dynamic_rotate %1 by %c1_i32_16 dim 0 : vector<16x128xf32>, i32 -> vector<16x128xf32>
    %cst = arith.constant 0x7F800000 : f32
    %52 = vector.broadcast %cst : f32 to vector<16x128xf32>
    %53 = arith.select %42, %51, %52 : vector<16x128xi1>, vector<16x128xf32>
    %c15_i32_17 = arith.constant 15 : i32
    %54 = tpu.dynamic_rotate %1 by %c15_i32_17 dim 0 : vector<16x128xf32>, i32 -> vector<16x128xf32>
    %cst_18 = arith.constant 0x7F800000 : f32
    %55 = vector.broadcast %cst_18 : f32 to vector<16x128xf32>
    %56 = arith.select %44, %54, %55 : vector<16x128xi1>, vector<16x128xf32>
    %57 = arith.minimumf %53, %56 : vector<16x128xf32>
    %58 = arith.minimumf %57, %1 : vector<16x128xf32>
    %c1_i32_19 = arith.constant 1 : i32
    %59 = tpu.dynamic_rotate %1 by %c1_i32_19 dim 1 : vector<16x128xf32>, i32 -> vector<16x128xf32>
    %cst_20 = arith.constant 0x7F800000 : f32
    %60 = vector.broadcast %cst_20 : f32 to vector<16x128xf32>
    %61 = arith.select %47, %59, %60 : vector<16x128xi1>, vector<16x128xf32>
    %c127_i32 = arith.constant 127 : i32
    %62 = tpu.dynamic_rotate %1 by %c127_i32 dim 1 : vector<16x128xf32>, i32 -> vector<16x128xf32>
    %cst_21 = arith.constant 0x7F800000 : f32
    %63 = vector.broadcast %cst_21 : f32 to vector<16x128xf32>
    %64 = arith.select %50, %62, %63 : vector<16x128xi1>, vector<16x128xf32>
    %65 = arith.minimumf %61, %64 : vector<16x128xf32>
    %66 = arith.minimumf %65, %1 : vector<16x128xf32>
    %67 = arith.minimumf %58, %66 : vector<16x128xf32>
    %c1_i32_22 = arith.constant 1 : i32
    %68 = tpu.dynamic_rotate %67 by %c1_i32_22 dim 1 : vector<16x128xf32>, i32 -> vector<16x128xf32>
    %cst_23 = arith.constant 0xFF800000 : f32
    %69 = vector.broadcast %cst_23 : f32 to vector<16x128xf32>
    %70 = arith.select %47, %68, %69 : vector<16x128xi1>, vector<16x128xf32>
    %c127_i32_24 = arith.constant 127 : i32
    %71 = tpu.dynamic_rotate %67 by %c127_i32_24 dim 1 : vector<16x128xf32>, i32 -> vector<16x128xf32>
    %cst_25 = arith.constant 0xFF800000 : f32
    %72 = vector.broadcast %cst_25 : f32 to vector<16x128xf32>
    %73 = arith.select %50, %71, %72 : vector<16x128xi1>, vector<16x128xf32>
    %74 = arith.maximumf %70, %73 : vector<16x128xf32>
    %75 = arith.maximumf %74, %67 : vector<16x128xf32>
    %c1_i32_26 = arith.constant 1 : i32
    %76 = tpu.dynamic_rotate %75 by %c1_i32_26 dim 0 : vector<16x128xf32>, i32 -> vector<16x128xf32>
    %cst_27 = arith.constant 0xFF800000 : f32
    %77 = vector.broadcast %cst_27 : f32 to vector<16x128xf32>
    %78 = arith.select %42, %76, %77 : vector<16x128xi1>, vector<16x128xf32>
    %c15_i32_28 = arith.constant 15 : i32
    %79 = tpu.dynamic_rotate %75 by %c15_i32_28 dim 0 : vector<16x128xf32>, i32 -> vector<16x128xf32>
    %cst_29 = arith.constant 0xFF800000 : f32
    %80 = vector.broadcast %cst_29 : f32 to vector<16x128xf32>
    %81 = arith.select %44, %79, %80 : vector<16x128xi1>, vector<16x128xf32>
    %82 = arith.maximumf %78, %81 : vector<16x128xf32>
    %83 = arith.maximumf %82, %75 : vector<16x128xf32>
    %84 = arith.subf %1, %83 : vector<16x128xf32>
    %cst_30 = arith.constant 0.000000e+00 : f32
    %85 = vector.broadcast %cst_30 : f32 to vector<16x128xf32>
    %86 = arith.maximumf %84, %85 : vector<16x128xf32>
    %c1_i32_31 = arith.constant 1 : i32
    %87 = tpu.dynamic_rotate %67 by %c1_i32_31 dim 0 : vector<16x128xf32>, i32 -> vector<16x128xf32>
    %cst_32 = arith.constant 0x7F800000 : f32
    %88 = vector.broadcast %cst_32 : f32 to vector<16x128xf32>
    %89 = arith.select %42, %87, %88 : vector<16x128xi1>, vector<16x128xf32>
    %c15_i32_33 = arith.constant 15 : i32
    %90 = tpu.dynamic_rotate %67 by %c15_i32_33 dim 0 : vector<16x128xf32>, i32 -> vector<16x128xf32>
    %cst_34 = arith.constant 0x7F800000 : f32
    %91 = vector.broadcast %cst_34 : f32 to vector<16x128xf32>
    %92 = arith.select %44, %90, %91 : vector<16x128xi1>, vector<16x128xf32>
    %93 = arith.minimumf %89, %92 : vector<16x128xf32>
    %94 = arith.minimumf %93, %67 : vector<16x128xf32>
    %c1_i32_35 = arith.constant 1 : i32
    %95 = tpu.dynamic_rotate %67 by %c1_i32_35 dim 1 : vector<16x128xf32>, i32 -> vector<16x128xf32>
    %cst_36 = arith.constant 0x7F800000 : f32
    %96 = vector.broadcast %cst_36 : f32 to vector<16x128xf32>
    %97 = arith.select %47, %95, %96 : vector<16x128xi1>, vector<16x128xf32>
    %c127_i32_37 = arith.constant 127 : i32
    %98 = tpu.dynamic_rotate %67 by %c127_i32_37 dim 1 : vector<16x128xf32>, i32 -> vector<16x128xf32>
    %cst_38 = arith.constant 0x7F800000 : f32
    %99 = vector.broadcast %cst_38 : f32 to vector<16x128xf32>
    %100 = arith.select %50, %98, %99 : vector<16x128xi1>, vector<16x128xf32>
    %101 = arith.minimumf %97, %100 : vector<16x128xf32>
    %102 = arith.minimumf %101, %67 : vector<16x128xf32>
    %103 = arith.minimumf %94, %102 : vector<16x128xf32>
    %c1_i32_39 = arith.constant 1 : i32
    %104 = tpu.dynamic_rotate %103 by %c1_i32_39 dim 1 : vector<16x128xf32>, i32 -> vector<16x128xf32>
    %cst_40 = arith.constant 0xFF800000 : f32
    %105 = vector.broadcast %cst_40 : f32 to vector<16x128xf32>
    %106 = arith.select %47, %104, %105 : vector<16x128xi1>, vector<16x128xf32>
    %c127_i32_41 = arith.constant 127 : i32
    %107 = tpu.dynamic_rotate %103 by %c127_i32_41 dim 1 : vector<16x128xf32>, i32 -> vector<16x128xf32>
    %cst_42 = arith.constant 0xFF800000 : f32
    %108 = vector.broadcast %cst_42 : f32 to vector<16x128xf32>
    %109 = arith.select %50, %107, %108 : vector<16x128xi1>, vector<16x128xf32>
    %110 = arith.maximumf %106, %109 : vector<16x128xf32>
    %111 = arith.maximumf %110, %103 : vector<16x128xf32>
    %c1_i32_43 = arith.constant 1 : i32
    %112 = tpu.dynamic_rotate %111 by %c1_i32_43 dim 0 : vector<16x128xf32>, i32 -> vector<16x128xf32>
    %cst_44 = arith.constant 0xFF800000 : f32
    %113 = vector.broadcast %cst_44 : f32 to vector<16x128xf32>
    %114 = arith.select %42, %112, %113 : vector<16x128xi1>, vector<16x128xf32>
    %c15_i32_45 = arith.constant 15 : i32
    %115 = tpu.dynamic_rotate %111 by %c15_i32_45 dim 0 : vector<16x128xf32>, i32 -> vector<16x128xf32>
    %cst_46 = arith.constant 0xFF800000 : f32
    %116 = vector.broadcast %cst_46 : f32 to vector<16x128xf32>
    %117 = arith.select %44, %115, %116 : vector<16x128xi1>, vector<16x128xf32>
    %118 = arith.maximumf %114, %117 : vector<16x128xf32>
    %119 = arith.maximumf %118, %111 : vector<16x128xf32>
    %120 = arith.subf %67, %119 : vector<16x128xf32>
    %cst_47 = arith.constant 0.000000e+00 : f32
    %121 = vector.broadcast %cst_47 : f32 to vector<16x128xf32>
    %122 = arith.maximumf %120, %121 : vector<16x128xf32>
    %123 = arith.mulf %86, %122 : vector<16x128xf32>
    %124 = arith.subf %122, %123 : vector<16x128xf32>
    %cst_48 = arith.constant 0.000000e+00 : f32
    %125 = vector.broadcast %cst_48 : f32 to vector<16x128xf32>
    %126 = arith.maximumf %124, %125 : vector<16x128xf32>
    %127 = arith.addf %86, %126 : vector<16x128xf32>
    %c1_i32_49 = arith.constant 1 : i32
    %128 = tpu.dynamic_rotate %103 by %c1_i32_49 dim 0 : vector<16x128xf32>, i32 -> vector<16x128xf32>
    %cst_50 = arith.constant 0x7F800000 : f32
    %129 = vector.broadcast %cst_50 : f32 to vector<16x128xf32>
    %130 = arith.select %42, %128, %129 : vector<16x128xi1>, vector<16x128xf32>
    %c15_i32_51 = arith.constant 15 : i32
    %131 = tpu.dynamic_rotate %103 by %c15_i32_51 dim 0 : vector<16x128xf32>, i32 -> vector<16x128xf32>
    %cst_52 = arith.constant 0x7F800000 : f32
    %132 = vector.broadcast %cst_52 : f32 to vector<16x128xf32>
    %133 = arith.select %44, %131, %132 : vector<16x128xi1>, vector<16x128xf32>
    %134 = arith.minimumf %130, %133 : vector<16x128xf32>
    %135 = arith.minimumf %134, %103 : vector<16x128xf32>
    %c1_i32_53 = arith.constant 1 : i32
    %136 = tpu.dynamic_rotate %103 by %c1_i32_53 dim 1 : vector<16x128xf32>, i32 -> vector<16x128xf32>
    %cst_54 = arith.constant 0x7F800000 : f32
    %137 = vector.broadcast %cst_54 : f32 to vector<16x128xf32>
    %138 = arith.select %47, %136, %137 : vector<16x128xi1>, vector<16x128xf32>
    %c127_i32_55 = arith.constant 127 : i32
    %139 = tpu.dynamic_rotate %103 by %c127_i32_55 dim 1 : vector<16x128xf32>, i32 -> vector<16x128xf32>
    %cst_56 = arith.constant 0x7F800000 : f32
    %140 = vector.broadcast %cst_56 : f32 to vector<16x128xf32>
    %141 = arith.select %50, %139, %140 : vector<16x128xi1>, vector<16x128xf32>
    %142 = arith.minimumf %138, %141 : vector<16x128xf32>
    %143 = arith.minimumf %142, %103 : vector<16x128xf32>
    %144 = arith.minimumf %135, %143 : vector<16x128xf32>
    %c1_i32_57 = arith.constant 1 : i32
    %145 = tpu.dynamic_rotate %144 by %c1_i32_57 dim 1 : vector<16x128xf32>, i32 -> vector<16x128xf32>
    %cst_58 = arith.constant 0xFF800000 : f32
    %146 = vector.broadcast %cst_58 : f32 to vector<16x128xf32>
    %147 = arith.select %47, %145, %146 : vector<16x128xi1>, vector<16x128xf32>
    %c127_i32_59 = arith.constant 127 : i32
    %148 = tpu.dynamic_rotate %144 by %c127_i32_59 dim 1 : vector<16x128xf32>, i32 -> vector<16x128xf32>
    %cst_60 = arith.constant 0xFF800000 : f32
    %149 = vector.broadcast %cst_60 : f32 to vector<16x128xf32>
    %150 = arith.select %50, %148, %149 : vector<16x128xi1>, vector<16x128xf32>
    %151 = arith.maximumf %147, %150 : vector<16x128xf32>
    %152 = arith.maximumf %151, %144 : vector<16x128xf32>
    %c1_i32_61 = arith.constant 1 : i32
    %153 = tpu.dynamic_rotate %152 by %c1_i32_61 dim 0 : vector<16x128xf32>, i32 -> vector<16x128xf32>
    %cst_62 = arith.constant 0xFF800000 : f32
    %154 = vector.broadcast %cst_62 : f32 to vector<16x128xf32>
    %155 = arith.select %42, %153, %154 : vector<16x128xi1>, vector<16x128xf32>
    %c15_i32_63 = arith.constant 15 : i32
    %156 = tpu.dynamic_rotate %152 by %c15_i32_63 dim 0 : vector<16x128xf32>, i32 -> vector<16x128xf32>
    %cst_64 = arith.constant 0xFF800000 : f32
    %157 = vector.broadcast %cst_64 : f32 to vector<16x128xf32>
    %158 = arith.select %44, %156, %157 : vector<16x128xi1>, vector<16x128xf32>
    %159 = arith.maximumf %155, %158 : vector<16x128xf32>
    %160 = arith.maximumf %159, %152 : vector<16x128xf32>
    %161 = arith.subf %103, %160 : vector<16x128xf32>
    %cst_65 = arith.constant 0.000000e+00 : f32
    %162 = vector.broadcast %cst_65 : f32 to vector<16x128xf32>
    %163 = arith.maximumf %161, %162 : vector<16x128xf32>
    %164 = arith.mulf %127, %163 : vector<16x128xf32>
    %165 = arith.subf %163, %164 : vector<16x128xf32>
    %cst_66 = arith.constant 0.000000e+00 : f32
    %166 = vector.broadcast %cst_66 : f32 to vector<16x128xf32>
    %167 = arith.maximumf %165, %166 : vector<16x128xf32>
    %168 = arith.addf %127, %167 : vector<16x128xf32>
    %c1_i32_67 = arith.constant 1 : i32
    %169 = tpu.dynamic_rotate %144 by %c1_i32_67 dim 0 : vector<16x128xf32>, i32 -> vector<16x128xf32>
    %cst_68 = arith.constant 0x7F800000 : f32
    %170 = vector.broadcast %cst_68 : f32 to vector<16x128xf32>
    %171 = arith.select %42, %169, %170 : vector<16x128xi1>, vector<16x128xf32>
    %c15_i32_69 = arith.constant 15 : i32
    %172 = tpu.dynamic_rotate %144 by %c15_i32_69 dim 0 : vector<16x128xf32>, i32 -> vector<16x128xf32>
    %cst_70 = arith.constant 0x7F800000 : f32
    %173 = vector.broadcast %cst_70 : f32 to vector<16x128xf32>
    %174 = arith.select %44, %172, %173 : vector<16x128xi1>, vector<16x128xf32>
    %175 = arith.minimumf %171, %174 : vector<16x128xf32>
    %176 = arith.minimumf %175, %144 : vector<16x128xf32>
    %c1_i32_71 = arith.constant 1 : i32
    %177 = tpu.dynamic_rotate %144 by %c1_i32_71 dim 1 : vector<16x128xf32>, i32 -> vector<16x128xf32>
    %cst_72 = arith.constant 0x7F800000 : f32
    %178 = vector.broadcast %cst_72 : f32 to vector<16x128xf32>
    %179 = arith.select %47, %177, %178 : vector<16x128xi1>, vector<16x128xf32>
    %c127_i32_73 = arith.constant 127 : i32
    %180 = tpu.dynamic_rotate %144 by %c127_i32_73 dim 1 : vector<16x128xf32>, i32 -> vector<16x128xf32>
    %cst_74 = arith.constant 0x7F800000 : f32
    %181 = vector.broadcast %cst_74 : f32 to vector<16x128xf32>
    %182 = arith.select %50, %180, %181 : vector<16x128xi1>, vector<16x128xf32>
    %183 = arith.minimumf %179, %182 : vector<16x128xf32>
    %184 = arith.minimumf %183, %144 : vector<16x128xf32>
    %185 = arith.minimumf %176, %184 : vector<16x128xf32>
    %c1_i32_75 = arith.constant 1 : i32
    %186 = tpu.dynamic_rotate %185 by %c1_i32_75 dim 1 : vector<16x128xf32>, i32 -> vector<16x128xf32>
    %cst_76 = arith.constant 0xFF800000 : f32
    %187 = vector.broadcast %cst_76 : f32 to vector<16x128xf32>
    %188 = arith.select %47, %186, %187 : vector<16x128xi1>, vector<16x128xf32>
    %c127_i32_77 = arith.constant 127 : i32
    %189 = tpu.dynamic_rotate %185 by %c127_i32_77 dim 1 : vector<16x128xf32>, i32 -> vector<16x128xf32>
    %cst_78 = arith.constant 0xFF800000 : f32
    %190 = vector.broadcast %cst_78 : f32 to vector<16x128xf32>
    %191 = arith.select %50, %189, %190 : vector<16x128xi1>, vector<16x128xf32>
    %192 = arith.maximumf %188, %191 : vector<16x128xf32>
    %193 = arith.maximumf %192, %185 : vector<16x128xf32>
    %c1_i32_79 = arith.constant 1 : i32
    %194 = tpu.dynamic_rotate %193 by %c1_i32_79 dim 0 : vector<16x128xf32>, i32 -> vector<16x128xf32>
    %cst_80 = arith.constant 0xFF800000 : f32
    %195 = vector.broadcast %cst_80 : f32 to vector<16x128xf32>
    %196 = arith.select %42, %194, %195 : vector<16x128xi1>, vector<16x128xf32>
    %c15_i32_81 = arith.constant 15 : i32
    %197 = tpu.dynamic_rotate %193 by %c15_i32_81 dim 0 : vector<16x128xf32>, i32 -> vector<16x128xf32>
    %cst_82 = arith.constant 0xFF800000 : f32
    %198 = vector.broadcast %cst_82 : f32 to vector<16x128xf32>
    %199 = arith.select %44, %197, %198 : vector<16x128xi1>, vector<16x128xf32>
    %200 = arith.maximumf %196, %199 : vector<16x128xf32>
    %201 = arith.maximumf %200, %193 : vector<16x128xf32>
    %202 = arith.subf %144, %201 : vector<16x128xf32>
    %cst_83 = arith.constant 0.000000e+00 : f32
    %203 = vector.broadcast %cst_83 : f32 to vector<16x128xf32>
    %204 = arith.maximumf %202, %203 : vector<16x128xf32>
    %205 = arith.mulf %168, %204 : vector<16x128xf32>
    %206 = arith.subf %204, %205 : vector<16x128xf32>
    %cst_84 = arith.constant 0.000000e+00 : f32
    %207 = vector.broadcast %cst_84 : f32 to vector<16x128xf32>
    %208 = arith.maximumf %206, %207 : vector<16x128xf32>
    %209 = arith.addf %168, %208 : vector<16x128xf32>
    %c1_i32_85 = arith.constant 1 : i32
    %210 = tpu.dynamic_rotate %0 by %c1_i32_85 dim 0 : vector<16x128xf32>, i32 -> vector<16x128xf32>
    %cst_86 = arith.constant 0x7F800000 : f32
    %211 = vector.broadcast %cst_86 : f32 to vector<16x128xf32>
    %212 = arith.select %42, %210, %211 : vector<16x128xi1>, vector<16x128xf32>
    %c15_i32_87 = arith.constant 15 : i32
    %213 = tpu.dynamic_rotate %0 by %c15_i32_87 dim 0 : vector<16x128xf32>, i32 -> vector<16x128xf32>
    %cst_88 = arith.constant 0x7F800000 : f32
    %214 = vector.broadcast %cst_88 : f32 to vector<16x128xf32>
    %215 = arith.select %44, %213, %214 : vector<16x128xi1>, vector<16x128xf32>
    %216 = arith.minimumf %212, %215 : vector<16x128xf32>
    %217 = arith.minimumf %216, %0 : vector<16x128xf32>
    %c1_i32_89 = arith.constant 1 : i32
    %218 = tpu.dynamic_rotate %0 by %c1_i32_89 dim 1 : vector<16x128xf32>, i32 -> vector<16x128xf32>
    %cst_90 = arith.constant 0x7F800000 : f32
    %219 = vector.broadcast %cst_90 : f32 to vector<16x128xf32>
    %220 = arith.select %47, %218, %219 : vector<16x128xi1>, vector<16x128xf32>
    %c127_i32_91 = arith.constant 127 : i32
    %221 = tpu.dynamic_rotate %0 by %c127_i32_91 dim 1 : vector<16x128xf32>, i32 -> vector<16x128xf32>
    %cst_92 = arith.constant 0x7F800000 : f32
    %222 = vector.broadcast %cst_92 : f32 to vector<16x128xf32>
    %223 = arith.select %50, %221, %222 : vector<16x128xi1>, vector<16x128xf32>
    %224 = arith.minimumf %220, %223 : vector<16x128xf32>
    %225 = arith.minimumf %224, %0 : vector<16x128xf32>
    %226 = arith.minimumf %217, %225 : vector<16x128xf32>
    %c1_i32_93 = arith.constant 1 : i32
    %227 = tpu.dynamic_rotate %226 by %c1_i32_93 dim 1 : vector<16x128xf32>, i32 -> vector<16x128xf32>
    %cst_94 = arith.constant 0xFF800000 : f32
    %228 = vector.broadcast %cst_94 : f32 to vector<16x128xf32>
    %229 = arith.select %47, %227, %228 : vector<16x128xi1>, vector<16x128xf32>
    %c127_i32_95 = arith.constant 127 : i32
    %230 = tpu.dynamic_rotate %226 by %c127_i32_95 dim 1 : vector<16x128xf32>, i32 -> vector<16x128xf32>
    %cst_96 = arith.constant 0xFF800000 : f32
    %231 = vector.broadcast %cst_96 : f32 to vector<16x128xf32>
    %232 = arith.select %50, %230, %231 : vector<16x128xi1>, vector<16x128xf32>
    %233 = arith.maximumf %229, %232 : vector<16x128xf32>
    %234 = arith.maximumf %233, %226 : vector<16x128xf32>
    %c1_i32_97 = arith.constant 1 : i32
    %235 = tpu.dynamic_rotate %234 by %c1_i32_97 dim 0 : vector<16x128xf32>, i32 -> vector<16x128xf32>
    %cst_98 = arith.constant 0xFF800000 : f32
    %236 = vector.broadcast %cst_98 : f32 to vector<16x128xf32>
    %237 = arith.select %42, %235, %236 : vector<16x128xi1>, vector<16x128xf32>
    %c15_i32_99 = arith.constant 15 : i32
    %238 = tpu.dynamic_rotate %234 by %c15_i32_99 dim 0 : vector<16x128xf32>, i32 -> vector<16x128xf32>
    %cst_100 = arith.constant 0xFF800000 : f32
    %239 = vector.broadcast %cst_100 : f32 to vector<16x128xf32>
    %240 = arith.select %44, %238, %239 : vector<16x128xi1>, vector<16x128xf32>
    %241 = arith.maximumf %237, %240 : vector<16x128xf32>
    %242 = arith.maximumf %241, %234 : vector<16x128xf32>
    %243 = arith.subf %0, %242 : vector<16x128xf32>
    %cst_101 = arith.constant 0.000000e+00 : f32
    %244 = vector.broadcast %cst_101 : f32 to vector<16x128xf32>
    %245 = arith.maximumf %243, %244 : vector<16x128xf32>
    %c1_i32_102 = arith.constant 1 : i32
    %246 = tpu.dynamic_rotate %226 by %c1_i32_102 dim 0 : vector<16x128xf32>, i32 -> vector<16x128xf32>
    %cst_103 = arith.constant 0x7F800000 : f32
    %247 = vector.broadcast %cst_103 : f32 to vector<16x128xf32>
    %248 = arith.select %42, %246, %247 : vector<16x128xi1>, vector<16x128xf32>
    %c15_i32_104 = arith.constant 15 : i32
    %249 = tpu.dynamic_rotate %226 by %c15_i32_104 dim 0 : vector<16x128xf32>, i32 -> vector<16x128xf32>
    %cst_105 = arith.constant 0x7F800000 : f32
    %250 = vector.broadcast %cst_105 : f32 to vector<16x128xf32>
    %251 = arith.select %44, %249, %250 : vector<16x128xi1>, vector<16x128xf32>
    %252 = arith.minimumf %248, %251 : vector<16x128xf32>
    %253 = arith.minimumf %252, %226 : vector<16x128xf32>
    %c1_i32_106 = arith.constant 1 : i32
    %254 = tpu.dynamic_rotate %226 by %c1_i32_106 dim 1 : vector<16x128xf32>, i32 -> vector<16x128xf32>
    %cst_107 = arith.constant 0x7F800000 : f32
    %255 = vector.broadcast %cst_107 : f32 to vector<16x128xf32>
    %256 = arith.select %47, %254, %255 : vector<16x128xi1>, vector<16x128xf32>
    %c127_i32_108 = arith.constant 127 : i32
    %257 = tpu.dynamic_rotate %226 by %c127_i32_108 dim 1 : vector<16x128xf32>, i32 -> vector<16x128xf32>
    %cst_109 = arith.constant 0x7F800000 : f32
    %258 = vector.broadcast %cst_109 : f32 to vector<16x128xf32>
    %259 = arith.select %50, %257, %258 : vector<16x128xi1>, vector<16x128xf32>
    %260 = arith.minimumf %256, %259 : vector<16x128xf32>
    %261 = arith.minimumf %260, %226 : vector<16x128xf32>
    %262 = arith.minimumf %253, %261 : vector<16x128xf32>
    %c1_i32_110 = arith.constant 1 : i32
    %263 = tpu.dynamic_rotate %262 by %c1_i32_110 dim 1 : vector<16x128xf32>, i32 -> vector<16x128xf32>
    %cst_111 = arith.constant 0xFF800000 : f32
    %264 = vector.broadcast %cst_111 : f32 to vector<16x128xf32>
    %265 = arith.select %47, %263, %264 : vector<16x128xi1>, vector<16x128xf32>
    %c127_i32_112 = arith.constant 127 : i32
    %266 = tpu.dynamic_rotate %262 by %c127_i32_112 dim 1 : vector<16x128xf32>, i32 -> vector<16x128xf32>
    %cst_113 = arith.constant 0xFF800000 : f32
    %267 = vector.broadcast %cst_113 : f32 to vector<16x128xf32>
    %268 = arith.select %50, %266, %267 : vector<16x128xi1>, vector<16x128xf32>
    %269 = arith.maximumf %265, %268 : vector<16x128xf32>
    %270 = arith.maximumf %269, %262 : vector<16x128xf32>
    %c1_i32_114 = arith.constant 1 : i32
    %271 = tpu.dynamic_rotate %270 by %c1_i32_114 dim 0 : vector<16x128xf32>, i32 -> vector<16x128xf32>
    %cst_115 = arith.constant 0xFF800000 : f32
    %272 = vector.broadcast %cst_115 : f32 to vector<16x128xf32>
    %273 = arith.select %42, %271, %272 : vector<16x128xi1>, vector<16x128xf32>
    %c15_i32_116 = arith.constant 15 : i32
    %274 = tpu.dynamic_rotate %270 by %c15_i32_116 dim 0 : vector<16x128xf32>, i32 -> vector<16x128xf32>
    %cst_117 = arith.constant 0xFF800000 : f32
    %275 = vector.broadcast %cst_117 : f32 to vector<16x128xf32>
    %276 = arith.select %44, %274, %275 : vector<16x128xi1>, vector<16x128xf32>
    %277 = arith.maximumf %273, %276 : vector<16x128xf32>
    %278 = arith.maximumf %277, %270 : vector<16x128xf32>
    %279 = arith.subf %226, %278 : vector<16x128xf32>
    %cst_118 = arith.constant 0.000000e+00 : f32
    %280 = vector.broadcast %cst_118 : f32 to vector<16x128xf32>
    %281 = arith.maximumf %279, %280 : vector<16x128xf32>
    %282 = arith.mulf %245, %281 : vector<16x128xf32>
    %283 = arith.subf %281, %282 : vector<16x128xf32>
    %cst_119 = arith.constant 0.000000e+00 : f32
    %284 = vector.broadcast %cst_119 : f32 to vector<16x128xf32>
    %285 = arith.maximumf %283, %284 : vector<16x128xf32>
    %286 = arith.addf %245, %285 : vector<16x128xf32>
    %c1_i32_120 = arith.constant 1 : i32
    %287 = tpu.dynamic_rotate %262 by %c1_i32_120 dim 0 : vector<16x128xf32>, i32 -> vector<16x128xf32>
    %cst_121 = arith.constant 0x7F800000 : f32
    %288 = vector.broadcast %cst_121 : f32 to vector<16x128xf32>
    %289 = arith.select %42, %287, %288 : vector<16x128xi1>, vector<16x128xf32>
    %c15_i32_122 = arith.constant 15 : i32
    %290 = tpu.dynamic_rotate %262 by %c15_i32_122 dim 0 : vector<16x128xf32>, i32 -> vector<16x128xf32>
    %cst_123 = arith.constant 0x7F800000 : f32
    %291 = vector.broadcast %cst_123 : f32 to vector<16x128xf32>
    %292 = arith.select %44, %290, %291 : vector<16x128xi1>, vector<16x128xf32>
    %293 = arith.minimumf %289, %292 : vector<16x128xf32>
    %294 = arith.minimumf %293, %262 : vector<16x128xf32>
    %c1_i32_124 = arith.constant 1 : i32
    %295 = tpu.dynamic_rotate %262 by %c1_i32_124 dim 1 : vector<16x128xf32>, i32 -> vector<16x128xf32>
    %cst_125 = arith.constant 0x7F800000 : f32
    %296 = vector.broadcast %cst_125 : f32 to vector<16x128xf32>
    %297 = arith.select %47, %295, %296 : vector<16x128xi1>, vector<16x128xf32>
    %c127_i32_126 = arith.constant 127 : i32
    %298 = tpu.dynamic_rotate %262 by %c127_i32_126 dim 1 : vector<16x128xf32>, i32 -> vector<16x128xf32>
    %cst_127 = arith.constant 0x7F800000 : f32
    %299 = vector.broadcast %cst_127 : f32 to vector<16x128xf32>
    %300 = arith.select %50, %298, %299 : vector<16x128xi1>, vector<16x128xf32>
    %301 = arith.minimumf %297, %300 : vector<16x128xf32>
    %302 = arith.minimumf %301, %262 : vector<16x128xf32>
    %303 = arith.minimumf %294, %302 : vector<16x128xf32>
    %c1_i32_128 = arith.constant 1 : i32
    %304 = tpu.dynamic_rotate %303 by %c1_i32_128 dim 1 : vector<16x128xf32>, i32 -> vector<16x128xf32>
    %cst_129 = arith.constant 0xFF800000 : f32
    %305 = vector.broadcast %cst_129 : f32 to vector<16x128xf32>
    %306 = arith.select %47, %304, %305 : vector<16x128xi1>, vector<16x128xf32>
    %c127_i32_130 = arith.constant 127 : i32
    %307 = tpu.dynamic_rotate %303 by %c127_i32_130 dim 1 : vector<16x128xf32>, i32 -> vector<16x128xf32>
    %cst_131 = arith.constant 0xFF800000 : f32
    %308 = vector.broadcast %cst_131 : f32 to vector<16x128xf32>
    %309 = arith.select %50, %307, %308 : vector<16x128xi1>, vector<16x128xf32>
    %310 = arith.maximumf %306, %309 : vector<16x128xf32>
    %311 = arith.maximumf %310, %303 : vector<16x128xf32>
    %c1_i32_132 = arith.constant 1 : i32
    %312 = tpu.dynamic_rotate %311 by %c1_i32_132 dim 0 : vector<16x128xf32>, i32 -> vector<16x128xf32>
    %cst_133 = arith.constant 0xFF800000 : f32
    %313 = vector.broadcast %cst_133 : f32 to vector<16x128xf32>
    %314 = arith.select %42, %312, %313 : vector<16x128xi1>, vector<16x128xf32>
    %c15_i32_134 = arith.constant 15 : i32
    %315 = tpu.dynamic_rotate %311 by %c15_i32_134 dim 0 : vector<16x128xf32>, i32 -> vector<16x128xf32>
    %cst_135 = arith.constant 0xFF800000 : f32
    %316 = vector.broadcast %cst_135 : f32 to vector<16x128xf32>
    %317 = arith.select %44, %315, %316 : vector<16x128xi1>, vector<16x128xf32>
    %318 = arith.maximumf %314, %317 : vector<16x128xf32>
    %319 = arith.maximumf %318, %311 : vector<16x128xf32>
    %320 = arith.subf %262, %319 : vector<16x128xf32>
    %cst_136 = arith.constant 0.000000e+00 : f32
    %321 = vector.broadcast %cst_136 : f32 to vector<16x128xf32>
    %322 = arith.maximumf %320, %321 : vector<16x128xf32>
    %323 = arith.mulf %286, %322 : vector<16x128xf32>
    %324 = arith.subf %322, %323 : vector<16x128xf32>
    %cst_137 = arith.constant 0.000000e+00 : f32
    %325 = vector.broadcast %cst_137 : f32 to vector<16x128xf32>
    %326 = arith.maximumf %324, %325 : vector<16x128xf32>
    %327 = arith.addf %286, %326 : vector<16x128xf32>
    %c1_i32_138 = arith.constant 1 : i32
    %328 = tpu.dynamic_rotate %303 by %c1_i32_138 dim 0 : vector<16x128xf32>, i32 -> vector<16x128xf32>
    %cst_139 = arith.constant 0x7F800000 : f32
    %329 = vector.broadcast %cst_139 : f32 to vector<16x128xf32>
    %330 = arith.select %42, %328, %329 : vector<16x128xi1>, vector<16x128xf32>
    %c15_i32_140 = arith.constant 15 : i32
    %331 = tpu.dynamic_rotate %303 by %c15_i32_140 dim 0 : vector<16x128xf32>, i32 -> vector<16x128xf32>
    %cst_141 = arith.constant 0x7F800000 : f32
    %332 = vector.broadcast %cst_141 : f32 to vector<16x128xf32>
    %333 = arith.select %44, %331, %332 : vector<16x128xi1>, vector<16x128xf32>
    %334 = arith.minimumf %330, %333 : vector<16x128xf32>
    %335 = arith.minimumf %334, %303 : vector<16x128xf32>
    %c1_i32_142 = arith.constant 1 : i32
    %336 = tpu.dynamic_rotate %303 by %c1_i32_142 dim 1 : vector<16x128xf32>, i32 -> vector<16x128xf32>
    %cst_143 = arith.constant 0x7F800000 : f32
    %337 = vector.broadcast %cst_143 : f32 to vector<16x128xf32>
    %338 = arith.select %47, %336, %337 : vector<16x128xi1>, vector<16x128xf32>
    %c127_i32_144 = arith.constant 127 : i32
    %339 = tpu.dynamic_rotate %303 by %c127_i32_144 dim 1 : vector<16x128xf32>, i32 -> vector<16x128xf32>
    %cst_145 = arith.constant 0x7F800000 : f32
    %340 = vector.broadcast %cst_145 : f32 to vector<16x128xf32>
    %341 = arith.select %50, %339, %340 : vector<16x128xi1>, vector<16x128xf32>
    %342 = arith.minimumf %338, %341 : vector<16x128xf32>
    %343 = arith.minimumf %342, %303 : vector<16x128xf32>
    %344 = arith.minimumf %335, %343 : vector<16x128xf32>
    %c1_i32_146 = arith.constant 1 : i32
    %345 = tpu.dynamic_rotate %344 by %c1_i32_146 dim 1 : vector<16x128xf32>, i32 -> vector<16x128xf32>
    %cst_147 = arith.constant 0xFF800000 : f32
    %346 = vector.broadcast %cst_147 : f32 to vector<16x128xf32>
    %347 = arith.select %47, %345, %346 : vector<16x128xi1>, vector<16x128xf32>
    %c127_i32_148 = arith.constant 127 : i32
    %348 = tpu.dynamic_rotate %344 by %c127_i32_148 dim 1 : vector<16x128xf32>, i32 -> vector<16x128xf32>
    %cst_149 = arith.constant 0xFF800000 : f32
    %349 = vector.broadcast %cst_149 : f32 to vector<16x128xf32>
    %350 = arith.select %50, %348, %349 : vector<16x128xi1>, vector<16x128xf32>
    %351 = arith.maximumf %347, %350 : vector<16x128xf32>
    %352 = arith.maximumf %351, %344 : vector<16x128xf32>
    %c1_i32_150 = arith.constant 1 : i32
    %353 = tpu.dynamic_rotate %352 by %c1_i32_150 dim 0 : vector<16x128xf32>, i32 -> vector<16x128xf32>
    %cst_151 = arith.constant 0xFF800000 : f32
    %354 = vector.broadcast %cst_151 : f32 to vector<16x128xf32>
    %355 = arith.select %42, %353, %354 : vector<16x128xi1>, vector<16x128xf32>
    %c15_i32_152 = arith.constant 15 : i32
    %356 = tpu.dynamic_rotate %352 by %c15_i32_152 dim 0 : vector<16x128xf32>, i32 -> vector<16x128xf32>
    %cst_153 = arith.constant 0xFF800000 : f32
    %357 = vector.broadcast %cst_153 : f32 to vector<16x128xf32>
    %358 = arith.select %44, %356, %357 : vector<16x128xi1>, vector<16x128xf32>
    %359 = arith.maximumf %355, %358 : vector<16x128xf32>
    %360 = arith.maximumf %359, %352 : vector<16x128xf32>
    %361 = arith.subf %303, %360 : vector<16x128xf32>
    %cst_154 = arith.constant 0.000000e+00 : f32
    %362 = vector.broadcast %cst_154 : f32 to vector<16x128xf32>
    %363 = arith.maximumf %361, %362 : vector<16x128xf32>
    %364 = arith.mulf %327, %363 : vector<16x128xf32>
    %365 = arith.subf %363, %364 : vector<16x128xf32>
    %cst_155 = arith.constant 0.000000e+00 : f32
    %366 = vector.broadcast %cst_155 : f32 to vector<16x128xf32>
    %367 = arith.maximumf %365, %366 : vector<16x128xf32>
    %368 = arith.addf %327, %367 : vector<16x128xf32>
    %369 = arith.mulf %0, %1 : vector<16x128xf32>
    %cst_156 = arith.constant dense<0.000000e+00> : vector<128xf32>
    %370 = vector.multi_reduction <add>, %369, %cst_156 [0] : vector<16x128xf32> to vector<128xf32>
    %371 = vector.shape_cast %370 : vector<128xf32> to vector<1x128xf32>
    %c0_157 = arith.constant 0 : index
    %c0_158 = arith.constant 0 : index
    %c0_159 = arith.constant 0 : index
    %372 = vector.load %arg3[%c0_157, %c0_158, %c0_159] : memref<1x8x128xf32, #tpu.memory_space<vmem>>, vector<1x1x128xf32>
    %373 = vector.shape_cast %372 : vector<1x1x128xf32> to vector<1x128xf32>
    %374 = vector.shape_cast %371 : vector<1x128xf32> to vector<1x1x128xf32>
    tpu.vector_store %arg3[%c0_157, %c0_158, %c0_159], %374 {strides = array<i32>} : memref<1x8x128xf32, #tpu.memory_space<vmem>>, vector<1x1x128xf32>,
    %cst_160 = arith.constant dense<0.000000e+00> : vector<128xf32>
    %375 = vector.multi_reduction <add>, %0, %cst_160 [0] : vector<16x128xf32> to vector<128xf32>
    %376 = vector.shape_cast %375 : vector<128xf32> to vector<1x128xf32>
    %c0_161 = arith.constant 0 : index
    %c1 = arith.constant 1 : index
    %c0_162 = arith.constant 0 : index
    %377 = vector.load %arg3[%c0_161, %c1, %c0_162] : memref<1x8x128xf32, #tpu.memory_space<vmem>>, vector<1x1x128xf32>
    %378 = vector.shape_cast %377 : vector<1x1x128xf32> to vector<1x128xf32>
    %379 = vector.shape_cast %376 : vector<1x128xf32> to vector<1x1x128xf32>
    tpu.vector_store %arg3[%c0_161, %c1, %c0_162], %379 {strides = array<i32>} : memref<1x8x128xf32, #tpu.memory_space<vmem>>, vector<1x1x128xf32>,
    %cst_163 = arith.constant dense<0.000000e+00> : vector<128xf32>
    %380 = vector.multi_reduction <add>, %1, %cst_163 [0] : vector<16x128xf32> to vector<128xf32>
    %381 = vector.shape_cast %380 : vector<128xf32> to vector<1x128xf32>
    %c0_164 = arith.constant 0 : index
    %c2 = arith.constant 2 : index
    %c0_165 = arith.constant 0 : index
    %382 = vector.load %arg3[%c0_164, %c2, %c0_165] : memref<1x8x128xf32, #tpu.memory_space<vmem>>, vector<1x1x128xf32>
    %383 = vector.shape_cast %382 : vector<1x1x128xf32> to vector<1x128xf32>
    %384 = vector.shape_cast %381 : vector<1x128xf32> to vector<1x1x128xf32>
    tpu.vector_store %arg3[%c0_164, %c2, %c0_165], %384 {strides = array<i32>} : memref<1x8x128xf32, #tpu.memory_space<vmem>>, vector<1x1x128xf32>,
    %385 = arith.mulf %209, %0 : vector<16x128xf32>
    %cst_166 = arith.constant dense<0.000000e+00> : vector<128xf32>
    %386 = vector.multi_reduction <add>, %385, %cst_166 [0] : vector<16x128xf32> to vector<128xf32>
    %387 = vector.shape_cast %386 : vector<128xf32> to vector<1x128xf32>
    %c0_167 = arith.constant 0 : index
    %c3 = arith.constant 3 : index
    %c0_168 = arith.constant 0 : index
    %388 = vector.load %arg3[%c0_167, %c3, %c0_168] : memref<1x8x128xf32, #tpu.memory_space<vmem>>, vector<1x1x128xf32>
    %389 = vector.shape_cast %388 : vector<1x1x128xf32> to vector<1x128xf32>
    %390 = vector.shape_cast %387 : vector<1x128xf32> to vector<1x1x128xf32>
    tpu.vector_store %arg3[%c0_167, %c3, %c0_168], %390 {strides = array<i32>} : memref<1x8x128xf32, #tpu.memory_space<vmem>>, vector<1x1x128xf32>,
    %cst_169 = arith.constant dense<0.000000e+00> : vector<128xf32>
    %391 = vector.multi_reduction <add>, %209, %cst_169 [0] : vector<16x128xf32> to vector<128xf32>
    %392 = vector.shape_cast %391 : vector<128xf32> to vector<1x128xf32>
    %c0_170 = arith.constant 0 : index
    %c4 = arith.constant 4 : index
    %c0_171 = arith.constant 0 : index
    %393 = vector.load %arg3[%c0_170, %c4, %c0_171] : memref<1x8x128xf32, #tpu.memory_space<vmem>>, vector<1x1x128xf32>
    %394 = vector.shape_cast %393 : vector<1x1x128xf32> to vector<1x128xf32>
    %395 = vector.shape_cast %392 : vector<1x128xf32> to vector<1x1x128xf32>
    tpu.vector_store %arg3[%c0_170, %c4, %c0_171], %395 {strides = array<i32>} : memref<1x8x128xf32, #tpu.memory_space<vmem>>, vector<1x1x128xf32>,
    %396 = arith.mulf %368, %1 : vector<16x128xf32>
    %cst_172 = arith.constant dense<0.000000e+00> : vector<128xf32>
    %397 = vector.multi_reduction <add>, %396, %cst_172 [0] : vector<16x128xf32> to vector<128xf32>
    %398 = vector.shape_cast %397 : vector<128xf32> to vector<1x128xf32>
    %c0_173 = arith.constant 0 : index
    %c5 = arith.constant 5 : index
    %c0_174 = arith.constant 0 : index
    %399 = vector.load %arg3[%c0_173, %c5, %c0_174] : memref<1x8x128xf32, #tpu.memory_space<vmem>>, vector<1x1x128xf32>
    %400 = vector.shape_cast %399 : vector<1x1x128xf32> to vector<1x128xf32>
    %401 = vector.shape_cast %398 : vector<1x128xf32> to vector<1x1x128xf32>
    tpu.vector_store %arg3[%c0_173, %c5, %c0_174], %401 {strides = array<i32>} : memref<1x8x128xf32, #tpu.memory_space<vmem>>, vector<1x1x128xf32>,
    %cst_175 = arith.constant dense<0.000000e+00> : vector<128xf32>
    %402 = vector.multi_reduction <add>, %368, %cst_175 [0] : vector<16x128xf32> to vector<128xf32>
    %403 = vector.shape_cast %402 : vector<128xf32> to vector<1x128xf32>
    %c0_176 = arith.constant 0 : index
    %c6 = arith.constant 6 : index
    %c0_177 = arith.constant 0 : index
    %404 = vector.load %arg3[%c0_176, %c6, %c0_177] : memref<1x8x128xf32, #tpu.memory_space<vmem>>, vector<1x1x128xf32>
    %405 = vector.shape_cast %404 : vector<1x1x128xf32> to vector<1x128xf32>
    %406 = vector.shape_cast %403 : vector<1x128xf32> to vector<1x1x128xf32>
    tpu.vector_store %arg3[%c0_176, %c6, %c0_177], %406 {strides = array<i32>} : memref<1x8x128xf32, #tpu.memory_space<vmem>>, vector<1x1x128xf32>,
    %cst_178 = arith.constant 0.000000e+00 : f32
    %407 = vector.broadcast %cst_178 : f32 to vector<1x128xf32>
    %c0_179 = arith.constant 0 : index
    %c7 = arith.constant 7 : index
    %c0_180 = arith.constant 0 : index
    %408 = vector.load %arg3[%c0_179, %c7, %c0_180] : memref<1x8x128xf32, #tpu.memory_space<vmem>>, vector<1x1x128xf32>
    %409 = vector.shape_cast %408 : vector<1x1x128xf32> to vector<1x128xf32>
    %410 = vector.shape_cast %407 : vector<1x128xf32> to vector<1x1x128xf32>
    tpu.vector_store %arg3[%c0_179, %c7, %c0_180], %410 {strides = array<i32>} : memref<1x8x128xf32, #tpu.memory_space<vmem>>, vector<1x1x128xf32>,
    return
  }
  func.func @transform_0(%arg0: i32) -> (i32, i32) {
    %c0_i32 = arith.constant 0 : i32
    %c0_i32_0 = arith.constant 0 : i32
    return %arg0, %c0_i32 : i32, i32
  }
  func.func @transform_1(%arg0: i32) -> (i32, i32) {
    %c0_i32 = arith.constant 0 : i32
    %c0_i32_0 = arith.constant 0 : i32
    return %arg0, %c0_i32 : i32, i32
  }
  func.func @transform_2(%arg0: i32) -> (i32, i32, i32) {
    %c0_i32 = arith.constant 0 : i32
    %c0_i32_0 = arith.constant 0 : i32
    %c0_i32_1 = arith.constant 0 : i32
    return %arg0, %c0_i32, %c0_i32_0 : i32, i32, i32
  }
}

</mosaic_0001>

<llo_original>
// kernel: tpu_custom_call.1
$region0: #{tpu_custom_call.1}
  #allocation0 [shape = 'u32[]', space=smem, size = 0x4, offset = 0x4, fixed_abs, tag = 'smem constant byte address 0x4 - core index']
  #allocation1 [shape = 'u32[72,128]{1,0:T(1,128)}', space=vmem, size = 0x9000, scoped, tag = 'internal scratch']
  %s0 = inlined_call_operand.hbm [shape: f32[16,128], index: 0, kind: input, shape index: {}]
  %s1 = inlined_call_operand.hbm [shape: f32[16,128], index: 1, kind: input, shape index: {}]
  %s2 = inlined_call_operand.hbm [shape: f32[1,8,128], index: 2, kind: output, shape index: {}]
  %s3 = sld [smem:[#allocation0]]
  $region26: #{tpu_custom_call.1} parent=0
    _
  %s5 = ssub.s32 1, %s3
  %s6 = scalar_select 0, %s5, %s3
  $region1: #{tpu_custom_call.1} parent=0
    #allocation2 [shape = 'u8[8192]{0}', space=vmem, size = 0x2000, scoped, tag = 'input window, operand 0, single buffered']
    #allocation3 [shape = 's32[1]{0}', space=sflag, size = 0x4, scoped, tag = 'scoped memory for tpu_custom_call.1']
    #allocation4 [shape = 's32[1]{0}', space=sflag, size = 0x4, scoped, tag = 'scoped memory for tpu_custom_call.1']
    #allocation5 [shape = 'u8[8192]{0}', space=vmem, size = 0x2000, scoped, tag = 'input window, operand 1, single buffered']
    #allocation6 [shape = 's32[1]{0}', space=sflag, size = 0x4, scoped, tag = 'scoped memory for tpu_custom_call.1']
    #allocation7 [shape = 'u8[4096]{0}', space=vmem, size = 0x1000, scoped, tag = 'output window, operand 0, single buffered']
    %7 = vsyncpa [#allocation3], 0
    %8 = vsyncpa [#allocation6], 0
    %9 = vsyncpa [#allocation4], 0
    // Predicated region
    $region2: #{tpu_custom_call.1} parent=1 // pred_check
      _
    $region3: #{tpu_custom_call.1} parent=1 // pred_check_branch
      %11 = sbr.rel (0) target = $region5
    $region4: #{tpu_custom_call.1} parent=1 // pred_region
      %13 = vsyncadd [#allocation3], 0
      %s14 = sshll.u32 %s0, 4
      %s15 = int_to_ptr.hbm [resolvable:$true] %s14
      %s16 = sshll.u32 [#allocation2], 4
      %s17 = int_to_ptr.vmem [resolvable:$true] %s16
      %22 = dma.hbm_to_vmem [thread:$0]  %s15, 256, %s17, [#allocation3], 128, 128, 8
    $region5: #{tpu_custom_call.1} parent=1 // pred_fallthru
      _
    // Predicated region
    $region6: #{tpu_custom_call.1} parent=1 // pred_check
      _
    $region7: #{tpu_custom_call.1} parent=1 // pred_check_branch
      %24 = sbr.rel (0) target = $region9
    $region8: #{tpu_custom_call.1} parent=1 // pred_region
      %26 = vsyncadd [#allocation6], 0
      %s27 = sshll.u32 %s1, 4
      %s28 = int_to_ptr.hbm [resolvable:$true] %s27
      %s29 = sshll.u32 [#allocation5], 4
      %s30 = int_to_ptr.vmem [resolvable:$true] %s29
      %35 = dma.hbm_to_vmem [thread:$0]  %s28, 256, %s30, [#allocation6], 128, 128, 8
    $region9: #{tpu_custom_call.1} parent=1 // pred_fallthru
      _
    // Predicated region
    $region10: #{tpu_custom_call.1} parent=1 // pred_check
      _
    $region11: #{tpu_custom_call.1} parent=1 // pred_check_branch
      %37 = sbr.rel (0) target = $region13
    $region12: #{tpu_custom_call.1} parent=1 // pred_region
      %39 = dma.done [#allocation3], 256
    $region13: #{tpu_custom_call.1} parent=1 // pred_fallthru
      _
    // Predicated region
    $region14: #{tpu_custom_call.1} parent=1 // pred_check
      _
    $region15: #{tpu_custom_call.1} parent=1 // pred_check_branch
      %41 = sbr.rel (0) target = $region17
    $region16: #{tpu_custom_call.1} parent=1 // pred_region
      %43 = dma.done [#allocation6], 256
    $region17: #{tpu_custom_call.1} parent=1 // pred_fallthru
      _
    %v44 = vld [vmem:[#allocation2] sm:$0xff]
    %v45 = vld [vmem:[#allocation2 + $0x8] sm:$0xff]
    %v46 = vld [vmem:[#allocation5] sm:$0xff]
    %v47 = vld [vmem:[#allocation5 + $0x8] sm:$0xff]
    %v48 = vlaneseq
    %v49 = vshrl.u32 %v48, 7
    %v50 = vadd.s32 %v49, 8
    %vm51 = vcmp.lt.s32.totalorder %v49, 0
    %v52 = vsub.s32 0, %v49
    %v53 = vsel %vm51, %v52, %v49
    %v54 = vshrl.u32 %v53, 4
    %v55 = vand.u32 %v53, 15
    %v56 = vsub.s32 0, %v55
    %v57 = vsel %vm51, %v56, %v55
    %vm58 = vcmp.lt.s32.totalorder %v50, 0
    %v59 = vsub.s32 0, %v50
    %v60 = vsel %vm58, %v59, %v50
    %v61 = vshrl.u32 %v60, 4
    %v62 = vand.u32 %v60, 15
    %v63 = vsub.s32 0, %v62
    %v64 = vsel %vm58, %v63, %v62
    %vm65 = vcmp.ne.s32.totalorder %v57, 0
    %vm66 = vcmp.ne.s32.totalorder %v64, 0
    %vm67 = vcmp.lt.s32.totalorder %v57, 0
    %vm68 = vcmp.lt.s32.totalorder %v64, 0
    %vm69 = vmand %vm67, %vm65
    %vm70 = vmand %vm68, %vm66
    %v71 = vadd.s32 %v57, 16
    %v72 = vadd.s32 %v64, 16
    %v73 = vsel %vm69, %v71, %v57
    %v74 = vsel %vm70, %v72, %v64
    %v75 = vlaneseq
    %v76 = vand.u32 %v75, 127
    %vm77 = vcmp.lt.s32.totalorder %v76, 0
    %v78 = vsub.s32 0, %v76
    %v79 = vsel %vm77, %v78, %v76
    %v80 = vshrl.u32 %v79, 4
    %v81 = vand.u32 %v79, 15
    %v82 = vsub.s32 0, %v81
    %v83 = vsel %vm77, %v82, %v81
    %vm84 = vcmp.ne.s32.totalorder %v83, 0
    %vm85 = vcmp.lt.s32.totalorder %v83, 0
    %vm86 = vmand %vm85, %vm84
    %v87 = vadd.s32 %v83, 16
    %v88 = vsel %vm86, %v87, %v83
    %vm89 = vcmp.lt.s32.totalorder %v76, 128
    %vm90 = vcmp.ge.s32.totalorder %v73, 1
    %vm91 = vcmp.ge.s32.totalorder %v74, 1
    %vm92 = vcmp.lt.s32.totalorder %v73, 16
    %vm93 = vcmp.lt.s32.totalorder %v74, 16
    %vm94 = vmand %vm90, %vm92
    %vm95 = vmand %vm91, %vm93
    %vm96 = vcmp.lt.s32.totalorder %v73, 15
    %vm97 = vcmp.lt.s32.totalorder %v74, 15
    %vm98 = vcmp.ge.s32.totalorder %v88, 1
    %vm99 = vmand %vm98, %vm89
    %vm100 = vcmp.lt.s32.totalorder %v88, 15
    %vm101 = vmand %vm100, %vm89
    %v102 = vrot.slane %v46, 7
    %v103 = vrot.slane %v47, 7
    %vm104 = vcmp.lt.s32.totalorder %v49, 1
    %v105 = vsel %vm104, %v102, %v103
    %v106 = vsel %vm104, %v103, %v102
    %v107 = vsel %vm94, %v106, inf
    %v108 = vsel %vm95, %v105, inf
    %v109 = vrot.slane %v46, 1
    %v110 = vrot.slane %v47, 1
    %vm111 = vcmp.lt.s32.totalorder %v49, 7
    %v112 = vsel %vm111, %v109, %v110
    %v113 = vsel %vm111, %v110, %v109
    %v114 = vsel %vm96, %v112, inf
    %v115 = vsel %vm97, %v113, inf
    %v116 = vmin.f32 %v107, %v114
    %v117 = vmin.f32 %v108, %v115
    %v118 = vmin.f32 %v116, %v46
    %v119 = vmin.f32 %v117, %v47
    %120 = vrot.lane.b32.xlu0 %v46, 1
    %v121 = vpop.permute.xlu0 %120
    %122 = vrot.lane.b32.xlu0 %v47, 1
    %v123 = vpop.permute.xlu0 %122
    %v124 = vsel %vm99, %v121, inf
    %v125 = vsel %vm99, %v123, inf
    %126 = vrot.lane.b32.xlu0 %v46, 127
    %v127 = vpop.permute.xlu0 %126
    %128 = vrot.lane.b32.xlu0 %v47, 127
    %v129 = vpop.permute.xlu0 %128
    %v130 = vsel %vm101, %v127, inf
    %v131 = vsel %vm101, %v129, inf
    %v132 = vmin.f32 %v124, %v130
    %v133 = vmin.f32 %v125, %v131
    %v134 = vmin.f32 %v132, %v46
    %v135 = vmin.f32 %v133, %v47
    %v136 = vmin.f32 %v118, %v134
    %v137 = vmin.f32 %v119, %v135
    %138 = vrot.lane.b32.xlu0 %v136, 1
    %v139 = vpop.permute.xlu0 %138
    %140 = vrot.lane.b32.xlu0 %v137, 1
    %v141 = vpop.permute.xlu0 %140
    %v142 = vsel %vm99, %v139, -inf
    %v143 = vsel %vm99, %v141, -inf
    %144 = vrot.lane.b32.xlu0 %v136, 127
    %v145 = vpop.permute.xlu0 %144
    %146 = vrot.lane.b32.xlu0 %v137, 127
    %v147 = vpop.permute.xlu0 %146
    %v148 = vsel %vm101, %v145, -inf
    %v149 = vsel %vm101, %v147, -inf
    %v150 = vmax.f32 %v142, %v148
    %v151 = vmax.f32 %v143, %v149
    %v152 = vmax.f32 %v150, %v136
    %v153 = vmax.f32 %v151, %v137
    %v154 = vrot.slane %v152, 7
    %v155 = vrot.slane %v153, 7
    %v156 = vsel %vm104, %v154, %v155
    %v157 = vsel %vm104, %v155, %v154
    %v158 = vsel %vm94, %v157, -inf
    %v159 = vsel %vm95, %v156, -inf
    %v160 = vrot.slane %v152, 1
    %v161 = vrot.slane %v153, 1
    %v162 = vsel %vm111, %v160, %v161
    %v163 = vsel %vm111, %v161, %v160
    %v164 = vsel %vm96, %v162, -inf
    %v165 = vsel %vm97, %v163, -inf
    %v166 = vmax.f32 %v158, %v164
    %v167 = vmax.f32 %v159, %v165
    %v168 = vmax.f32 %v166, %v152
    %v169 = vmax.f32 %v167, %v153
    %v170 = vsub.f32 %v46, %v168
    %v171 = vsub.f32 %v47, %v169
    %v172 = vmax.f32 %v170, 0.0
    %v173 = vmax.f32 %v171, 0.0
    %v174 = vrot.slane %v136, 7
    %v175 = vrot.slane %v137, 7
    %v176 = vsel %vm104, %v174, %v175
    %v177 = vsel %vm104, %v175, %v174
    %v178 = vsel %vm94, %v177, inf
    %v179 = vsel %vm95, %v176, inf
    %v180 = vrot.slane %v136, 1
    %v181 = vrot.slane %v137, 1
    %v182 = vsel %vm111, %v180, %v181
    %v183 = vsel %vm111, %v181, %v180
    %v184 = vsel %vm96, %v182, inf
    %v185 = vsel %vm97, %v183, inf
    %v186 = vmin.f32 %v178, %v184
    %v187 = vmin.f32 %v179, %v185
    %v188 = vmin.f32 %v186, %v136
    %v189 = vmin.f32 %v187, %v137
    %v190 = vsel %vm99, %v139, inf
    %v191 = vsel %vm99, %v141, inf
    %v192 = vsel %vm101, %v145, inf
    %v193 = vsel %vm101, %v147, inf
    %v194 = vmin.f32 %v190, %v192
    %v195 = vmin.f32 %v191, %v193
    %v196 = vmin.f32 %v194, %v136
    %v197 = vmin.f32 %v195, %v137
    %v198 = vmin.f32 %v188, %v196
    %v199 = vmin.f32 %v189, %v197
    %200 = vrot.lane.b32.xlu0 %v198, 1
    %v201 = vpop.permute.xlu0 %200
    %202 = vrot.lane.b32.xlu0 %v199, 1
    %v203 = vpop.permute.xlu0 %202
    %v204 = vsel %vm99, %v201, -inf
    %v205 = vsel %vm99, %v203, -inf
    %206 = vrot.lane.b32.xlu0 %v198, 127
    %v207 = vpop.permute.xlu0 %206
    %208 = vrot.lane.b32.xlu0 %v199, 127
    %v209 = vpop.permute.xlu0 %208
    %v210 = vsel %vm101, %v207, -inf
    %v211 = vsel %vm101, %v209, -inf
    %v212 = vmax.f32 %v204, %v210
    %v213 = vmax.f32 %v205, %v211
    %v214 = vmax.f32 %v212, %v198
    %v215 = vmax.f32 %v213, %v199
    %v216 = vrot.slane %v214, 7
    %v217 = vrot.slane %v215, 7
    %v218 = vsel %vm104, %v216, %v217
    %v219 = vsel %vm104, %v217, %v216
    %v220 = vsel %vm94, %v219, -inf
    %v221 = vsel %vm95, %v218, -inf
    %v222 = vrot.slane %v214, 1
    %v223 = vrot.slane %v215, 1
    %v224 = vsel %vm111, %v222, %v223
    %v225 = vsel %vm111, %v223, %v222
    %v226 = vsel %vm96, %v224, -inf
    %v227 = vsel %vm97, %v225, -inf
    %v228 = vmax.f32 %v220, %v226
    %v229 = vmax.f32 %v221, %v227
    %v230 = vmax.f32 %v228, %v214
    %v231 = vmax.f32 %v229, %v215
    %v232 = vsub.f32 %v136, %v230
    %v233 = vsub.f32 %v137, %v231
    %v234 = vmax.f32 %v232, 0.0
    %v235 = vmax.f32 %v233, 0.0
    %v236 = vmul.f32 %v172, %v234
    %v237 = vmul.f32 %v173, %v235
    %v238 = vsub.f32 %v234, %v236
    %v239 = vsub.f32 %v235, %v237
    %v240 = vmax.f32 %v238, 0.0
    %v241 = vmax.f32 %v239, 0.0
    %v242 = vadd.f32 %v172, %v240
    %v243 = vadd.f32 %v173, %v241
    %v244 = vrot.slane %v198, 7
    %v245 = vrot.slane %v199, 7
    %v246 = vsel %vm104, %v244, %v245
    %v247 = vsel %vm104, %v245, %v244
    %v248 = vsel %vm94, %v247, inf
    %v249 = vsel %vm95, %v246, inf
    %v250 = vrot.slane %v198, 1
    %v251 = vrot.slane %v199, 1
    %v252 = vsel %vm111, %v250, %v251
    %v253 = vsel %vm111, %v251, %v250
    %v254 = vsel %vm96, %v252, inf
    %v255 = vsel %vm97, %v253, inf
    %v256 = vmin.f32 %v248, %v254
    %v257 = vmin.f32 %v249, %v255
    %v258 = vmin.f32 %v256, %v198
    %v259 = vmin.f32 %v257, %v199
    %v260 = vsel %vm99, %v201, inf
    %v261 = vsel %vm99, %v203, inf
    %v262 = vsel %vm101, %v207, inf
    %v263 = vsel %vm101, %v209, inf
    %v264 = vmin.f32 %v260, %v262
    %v265 = vmin.f32 %v261, %v263
    %v266 = vmin.f32 %v264, %v198
    %v267 = vmin.f32 %v265, %v199
    %v268 = vmin.f32 %v258, %v266
    %v269 = vmin.f32 %v259, %v267
    %270 = vrot.lane.b32.xlu0 %v268, 1
    %v271 = vpop.permute.xlu0 %270
    %272 = vrot.lane.b32.xlu0 %v269, 1
    %v273 = vpop.permute.xlu0 %272
    %v274 = vsel %vm99, %v271, -inf
    %v275 = vsel %vm99, %v273, -inf
    %276 = vrot.lane.b32.xlu0 %v268, 127
    %v277 = vpop.permute.xlu0 %276
    %278 = vrot.lane.b32.xlu0 %v269, 127
    %v279 = vpop.permute.xlu0 %278
    %v280 = vsel %vm101, %v277, -inf
    %v281 = vsel %vm101, %v279, -inf
    %v282 = vmax.f32 %v274, %v280
    %v283 = vmax.f32 %v275, %v281
    %v284 = vmax.f32 %v282, %v268
    %v285 = vmax.f32 %v283, %v269
    %v286 = vrot.slane %v284, 7
    %v287 = vrot.slane %v285, 7
    %v288 = vsel %vm104, %v286, %v287
    %v289 = vsel %vm104, %v287, %v286
    %v290 = vsel %vm94, %v289, -inf
    %v291 = vsel %vm95, %v288, -inf
    %v292 = vrot.slane %v284, 1
    %v293 = vrot.slane %v285, 1
    %v294 = vsel %vm111, %v292, %v293
    %v295 = vsel %vm111, %v293, %v292
    %v296 = vsel %vm96, %v294, -inf
    %v297 = vsel %vm97, %v295, -inf
    %v298 = vmax.f32 %v290, %v296
    %v299 = vmax.f32 %v291, %v297
    %v300 = vmax.f32 %v298, %v284
    %v301 = vmax.f32 %v299, %v285
    %v302 = vsub.f32 %v198, %v300
    %v303 = vsub.f32 %v199, %v301
    %v304 = vmax.f32 %v302, 0.0
    %v305 = vmax.f32 %v303, 0.0
    %v306 = vmul.f32 %v242, %v304
    %v307 = vmul.f32 %v243, %v305
    %v308 = vsub.f32 %v304, %v306
    %v309 = vsub.f32 %v305, %v307
    %v310 = vmax.f32 %v308, 0.0
    %v311 = vmax.f32 %v309, 0.0
    %v312 = vadd.f32 %v242, %v310
    %v313 = vadd.f32 %v243, %v311
    %v314 = vrot.slane %v268, 7
    %v315 = vrot.slane %v269, 7
    %v316 = vsel %vm104, %v314, %v315
    %v317 = vsel %vm104, %v315, %v314
    %v318 = vsel %vm94, %v317, inf
    %v319 = vsel %vm95, %v316, inf
    %v320 = vrot.slane %v268, 1
    %v321 = vrot.slane %v269, 1
    %v322 = vsel %vm111, %v320, %v321
    %v323 = vsel %vm111, %v321, %v320
    %v324 = vsel %vm96, %v322, inf
    %v325 = vsel %vm97, %v323, inf
    %v326 = vmin.f32 %v318, %v324
    %v327 = vmin.f32 %v319, %v325
    %v328 = vmin.f32 %v326, %v268
    %v329 = vmin.f32 %v327, %v269
    %v330 = vsel %vm99, %v271, inf
    %v331 = vsel %vm99, %v273, inf
    %v332 = vsel %vm101, %v277, inf
    %v333 = vsel %vm101, %v279, inf
    %v334 = vmin.f32 %v330, %v332
    %v335 = vmin.f32 %v331, %v333
    %v336 = vmin.f32 %v334, %v268
    %v337 = vmin.f32 %v335, %v269
    %v338 = vmin.f32 %v328, %v336
    %v339 = vmin.f32 %v329, %v337
    %340 = vrot.lane.b32.xlu0 %v338, 1
    %v341 = vpop.permute.xlu0 %340
    %342 = vrot.lane.b32.xlu0 %v339, 1
    %v343 = vpop.permute.xlu0 %342
    %v344 = vsel %vm99, %v341, -inf
    %v345 = vsel %vm99, %v343, -inf
    %346 = vrot.lane.b32.xlu0 %v338, 127
    %v347 = vpop.permute.xlu0 %346
    %348 = vrot.lane.b32.xlu0 %v339, 127
    %v349 = vpop.permute.xlu0 %348
    %v350 = vsel %vm101, %v347, -inf
    %v351 = vsel %vm101, %v349, -inf
    %v352 = vmax.f32 %v344, %v350
    %v353 = vmax.f32 %v345, %v351
    %v354 = vmax.f32 %v352, %v338
    %v355 = vmax.f32 %v353, %v339
    %v356 = vrot.slane %v354, 7
    %v357 = vrot.slane %v355, 7
    %v358 = vsel %vm104, %v356, %v357
    %v359 = vsel %vm104, %v357, %v356
    %v360 = vsel %vm94, %v359, -inf
    %v361 = vsel %vm95, %v358, -inf
    %v362 = vrot.slane %v354, 1
    %v363 = vrot.slane %v355, 1
    %v364 = vsel %vm111, %v362, %v363
    %v365 = vsel %vm111, %v363, %v362
    %v366 = vsel %vm96, %v364, -inf
    %v367 = vsel %vm97, %v365, -inf
    %v368 = vmax.f32 %v360, %v366
    %v369 = vmax.f32 %v361, %v367
    %v370 = vmax.f32 %v368, %v354
    %v371 = vmax.f32 %v369, %v355
    %v372 = vsub.f32 %v268, %v370
    %v373 = vsub.f32 %v269, %v371
    %v374 = vmax.f32 %v372, 0.0
    %v375 = vmax.f32 %v373, 0.0
    %v376 = vmul.f32 %v312, %v374
    %v377 = vmul.f32 %v313, %v375
    %v378 = vsub.f32 %v374, %v376
    %v379 = vsub.f32 %v375, %v377
    %v380 = vmax.f32 %v378, 0.0
    %v381 = vmax.f32 %v379, 0.0
    %v382 = vadd.f32 %v312, %v380
    %v383 = vadd.f32 %v313, %v381
    %v384 = vrot.slane %v44, 7
    %v385 = vrot.slane %v45, 7
    %v386 = vsel %vm104, %v384, %v385
    %v387 = vsel %vm104, %v385, %v384
    %v388 = vsel %vm94, %v387, inf
    %v389 = vsel %vm95, %v386, inf
    %v390 = vrot.slane %v44, 1
    %v391 = vrot.slane %v45, 1
    %v392 = vsel %vm111, %v390, %v391
    %v393 = vsel %vm111, %v391, %v390
    %v394 = vsel %vm96, %v392, inf
    %v395 = vsel %vm97, %v393, inf
    %v396 = vmin.f32 %v388, %v394
    %v397 = vmin.f32 %v389, %v395
    %v398 = vmin.f32 %v396, %v44
    %v399 = vmin.f32 %v397, %v45
    %400 = vrot.lane.b32.xlu0 %v44, 1
    %v401 = vpop.permute.xlu0 %400
    %402 = vrot.lane.b32.xlu0 %v45, 1
    %v403 = vpop.permute.xlu0 %402
    %v404 = vsel %vm99, %v401, inf
    %v405 = vsel %vm99, %v403, inf
    %406 = vrot.lane.b32.xlu0 %v44, 127
    %v407 = vpop.permute.xlu0 %406
    %408 = vrot.lane.b32.xlu0 %v45, 127
    %v409 = vpop.permute.xlu0 %408
    %v410 = vsel %vm101, %v407, inf
    %v411 = vsel %vm101, %v409, inf
    %v412 = vmin.f32 %v404, %v410
    %v413 = vmin.f32 %v405, %v411
    %v414 = vmin.f32 %v412, %v44
    %v415 = vmin.f32 %v413, %v45
    %v416 = vmin.f32 %v398, %v414
    %v417 = vmin.f32 %v399, %v415
    %418 = vrot.lane.b32.xlu0 %v416, 1
    %v419 = vpop.permute.xlu0 %418
    %420 = vrot.lane.b32.xlu0 %v417, 1
    %v421 = vpop.permute.xlu0 %420
    %v422 = vsel %vm99, %v419, -inf
    %v423 = vsel %vm99, %v421, -inf
    %424 = vrot.lane.b32.xlu0 %v416, 127
    %v425 = vpop.permute.xlu0 %424
    %426 = vrot.lane.b32.xlu0 %v417, 127
    %v427 = vpop.permute.xlu0 %426
    %v428 = vsel %vm101, %v425, -inf
    %v429 = vsel %vm101, %v427, -inf
    %v430 = vmax.f32 %v422, %v428
    %v431 = vmax.f32 %v423, %v429
    %v432 = vmax.f32 %v430, %v416
    %v433 = vmax.f32 %v431, %v417
    %v434 = vrot.slane %v432, 7
    %v435 = vrot.slane %v433, 7
    %v436 = vsel %vm104, %v434, %v435
    %v437 = vsel %vm104, %v435, %v434
    %v438 = vsel %vm94, %v437, -inf
    %v439 = vsel %vm95, %v436, -inf
    %v440 = vrot.slane %v432, 1
    %v441 = vrot.slane %v433, 1
    %v442 = vsel %vm111, %v440, %v441
    %v443 = vsel %vm111, %v441, %v440
    %v444 = vsel %vm96, %v442, -inf
    %v445 = vsel %vm97, %v443, -inf
    %v446 = vmax.f32 %v438, %v444
    %v447 = vmax.f32 %v439, %v445
    %v448 = vmax.f32 %v446, %v432
    %v449 = vmax.f32 %v447, %v433
    %v450 = vsub.f32 %v44, %v448
    %v451 = vsub.f32 %v45, %v449
    %v452 = vmax.f32 %v450, 0.0
    %v453 = vmax.f32 %v451, 0.0
    %v454 = vrot.slane %v416, 7
    %v455 = vrot.slane %v417, 7
    %v456 = vsel %vm104, %v454, %v455
    %v457 = vsel %vm104, %v455, %v454
    %v458 = vsel %vm94, %v457, inf
    %v459 = vsel %vm95, %v456, inf
    %v460 = vrot.slane %v416, 1
    %v461 = vrot.slane %v417, 1
    %v462 = vsel %vm111, %v460, %v461
    %v463 = vsel %vm111, %v461, %v460
    %v464 = vsel %vm96, %v462, inf
    %v465 = vsel %vm97, %v463, inf
    %v466 = vmin.f32 %v458, %v464
    %v467 = vmin.f32 %v459, %v465
    %v468 = vmin.f32 %v466, %v416
    %v469 = vmin.f32 %v467, %v417
    %v470 = vsel %vm99, %v419, inf
    %v471 = vsel %vm99, %v421, inf
    %v472 = vsel %vm101, %v425, inf
    %v473 = vsel %vm101, %v427, inf
    %v474 = vmin.f32 %v470, %v472
    %v475 = vmin.f32 %v471, %v473
    %v476 = vmin.f32 %v474, %v416
    %v477 = vmin.f32 %v475, %v417
    %v478 = vmin.f32 %v468, %v476
    %v479 = vmin.f32 %v469, %v477
    %480 = vrot.lane.b32.xlu0 %v478, 1
    %v481 = vpop.permute.xlu0 %480
    %482 = vrot.lane.b32.xlu0 %v479, 1
    %v483 = vpop.permute.xlu0 %482
    %v484 = vsel %vm99, %v481, -inf
    %v485 = vsel %vm99, %v483, -inf
    %486 = vrot.lane.b32.xlu0 %v478, 127
    %v487 = vpop.permute.xlu0 %486
    %488 = vrot.lane.b32.xlu0 %v479, 127
    %v489 = vpop.permute.xlu0 %488
    %v490 = vsel %vm101, %v487, -inf
    %v491 = vsel %vm101, %v489, -inf
    %v492 = vmax.f32 %v484, %v490
    %v493 = vmax.f32 %v485, %v491
    %v494 = vmax.f32 %v492, %v478
    %v495 = vmax.f32 %v493, %v479
    %v496 = vrot.slane %v494, 7
    %v497 = vrot.slane %v495, 7
    %v498 = vsel %vm104, %v496, %v497
    %v499 = vsel %vm104, %v497, %v496
    %v500 = vsel %vm94, %v499, -inf
    %v501 = vsel %vm95, %v498, -inf
    %v502 = vrot.slane %v494, 1
    %v503 = vrot.slane %v495, 1
    %v504 = vsel %vm111, %v502, %v503
    %v505 = vsel %vm111, %v503, %v502
    %v506 = vsel %vm96, %v504, -inf
    %v507 = vsel %vm97, %v505, -inf
    %v508 = vmax.f32 %v500, %v506
    %v509 = vmax.f32 %v501, %v507
    %v510 = vmax.f32 %v508, %v494
    %v511 = vmax.f32 %v509, %v495
    %v512 = vsub.f32 %v416, %v510
    %v513 = vsub.f32 %v417, %v511
    %v514 = vmax.f32 %v512, 0.0
    %v515 = vmax.f32 %v513, 0.0
    %v516 = vmul.f32 %v452, %v514
    %v517 = vmul.f32 %v453, %v515
    %v518 = vsub.f32 %v514, %v516
    %v519 = vsub.f32 %v515, %v517
    %v520 = vmax.f32 %v518, 0.0
    %v521 = vmax.f32 %v519, 0.0
    %v522 = vadd.f32 %v452, %v520
    %v523 = vadd.f32 %v453, %v521
    %v524 = vrot.slane %v478, 7
    %v525 = vrot.slane %v479, 7
    %v526 = vsel %vm104, %v524, %v525
    %v527 = vsel %vm104, %v525, %v524
    %v528 = vsel %vm94, %v527, inf
    %v529 = vsel %vm95, %v526, inf
    %v530 = vrot.slane %v478, 1
    %v531 = vrot.slane %v479, 1
    %v532 = vsel %vm111, %v530, %v531
    %v533 = vsel %vm111, %v531, %v530
    %v534 = vsel %vm96, %v532, inf
    %v535 = vsel %vm97, %v533, inf
    %v536 = vmin.f32 %v528, %v534
    %v537 = vmin.f32 %v529, %v535
    %v538 = vmin.f32 %v536, %v478
    %v539 = vmin.f32 %v537, %v479
    %v540 = vsel %vm99, %v481, inf
    %v541 = vsel %vm99, %v483, inf
    %v542 = vsel %vm101, %v487, inf
    %v543 = vsel %vm101, %v489, inf
    %v544 = vmin.f32 %v540, %v542
    %v545 = vmin.f32 %v541, %v543
    %v546 = vmin.f32 %v544, %v478
    %v547 = vmin.f32 %v545, %v479
    %v548 = vmin.f32 %v538, %v546
    %v549 = vmin.f32 %v539, %v547
    %550 = vrot.lane.b32.xlu0 %v548, 1
    %v551 = vpop.permute.xlu0 %550
    %552 = vrot.lane.b32.xlu0 %v549, 1
    %v553 = vpop.permute.xlu0 %552
    %v554 = vsel %vm99, %v551, -inf
    %v555 = vsel %vm99, %v553, -inf
    %556 = vrot.lane.b32.xlu0 %v548, 127
    %v557 = vpop.permute.xlu0 %556
    %558 = vrot.lane.b32.xlu0 %v549, 127
    %v559 = vpop.permute.xlu0 %558
    %v560 = vsel %vm101, %v557, -inf
    %v561 = vsel %vm101, %v559, -inf
    %v562 = vmax.f32 %v554, %v560
    %v563 = vmax.f32 %v555, %v561
    %v564 = vmax.f32 %v562, %v548
    %v565 = vmax.f32 %v563, %v549
    %v566 = vrot.slane %v564, 7
    %v567 = vrot.slane %v565, 7
    %v568 = vsel %vm104, %v566, %v567
    %v569 = vsel %vm104, %v567, %v566
    %v570 = vsel %vm94, %v569, -inf
    %v571 = vsel %vm95, %v568, -inf
    %v572 = vrot.slane %v564, 1
    %v573 = vrot.slane %v565, 1
    %v574 = vsel %vm111, %v572, %v573
    %v575 = vsel %vm111, %v573, %v572
    %v576 = vsel %vm96, %v574, -inf
    %v577 = vsel %vm97, %v575, -inf
    %v578 = vmax.f32 %v570, %v576
    %v579 = vmax.f32 %v571, %v577
    %v580 = vmax.f32 %v578, %v564
    %v581 = vmax.f32 %v579, %v565
    %v582 = vsub.f32 %v478, %v580
    %v583 = vsub.f32 %v479, %v581
    %v584 = vmax.f32 %v582, 0.0
    %v585 = vmax.f32 %v583, 0.0
    %v586 = vmul.f32 %v522, %v584
    %v587 = vmul.f32 %v523, %v585
    %v588 = vsub.f32 %v584, %v586
    %v589 = vsub.f32 %v585, %v587
    %v590 = vmax.f32 %v588, 0.0
    %v591 = vmax.f32 %v589, 0.0
    %v592 = vadd.f32 %v522, %v590
    %v593 = vadd.f32 %v523, %v591
    %v594 = vrot.slane %v548, 7
    %v595 = vrot.slane %v549, 7
    %v596 = vsel %vm104, %v594, %v595
    %v597 = vsel %vm104, %v595, %v594
    %v598 = vsel %vm94, %v597, inf
    %v599 = vsel %vm95, %v596, inf
    %v600 = vrot.slane %v548, 1
    %v601 = vrot.slane %v549, 1
    %v602 = vsel %vm111, %v600, %v601
    %v603 = vsel %vm111, %v601, %v600
    %v604 = vsel %vm96, %v602, inf
    %v605 = vsel %vm97, %v603, inf
    %v606 = vmin.f32 %v598, %v604
    %v607 = vmin.f32 %v599, %v605
    %v608 = vmin.f32 %v606, %v548
    %v609 = vmin.f32 %v607, %v549
    %v610 = vsel %vm99, %v551, inf
    %v611 = vsel %vm99, %v553, inf
    %v612 = vsel %vm101, %v557, inf
    %v613 = vsel %vm101, %v559, inf
    %v614 = vmin.f32 %v610, %v612
    %v615 = vmin.f32 %v611, %v613
    %v616 = vmin.f32 %v614, %v548
    %v617 = vmin.f32 %v615, %v549
    %v618 = vmin.f32 %v608, %v616
    %v619 = vmin.f32 %v609, %v617
    %620 = vrot.lane.b32.xlu0 %v618, 1
    %v621 = vpop.permute.xlu0 %620
    %622 = vrot.lane.b32.xlu0 %v619, 1
    %v623 = vpop.permute.xlu0 %622
    %v624 = vsel %vm99, %v621, -inf
    %v625 = vsel %vm99, %v623, -inf
    %626 = vrot.lane.b32.xlu0 %v618, 127
    %v627 = vpop.permute.xlu0 %626
    %628 = vrot.lane.b32.xlu0 %v619, 127
    %v629 = vpop.permute.xlu0 %628
    %v630 = vsel %vm101, %v627, -inf
    %v631 = vsel %vm101, %v629, -inf
    %v632 = vmax.f32 %v624, %v630
    %v633 = vmax.f32 %v625, %v631
    %v634 = vmax.f32 %v632, %v618
    %v635 = vmax.f32 %v633, %v619
    %v636 = vrot.slane %v634, 7
    %v637 = vrot.slane %v635, 7
    %v638 = vsel %vm104, %v636, %v637
    %v639 = vsel %vm104, %v637, %v636
    %v640 = vsel %vm94, %v639, -inf
    %v641 = vsel %vm95, %v638, -inf
    %v642 = vrot.slane %v634, 1
    %v643 = vrot.slane %v635, 1
    %v644 = vsel %vm111, %v642, %v643
    %v645 = vsel %vm111, %v643, %v642
    %v646 = vsel %vm96, %v644, -inf
    %v647 = vsel %vm97, %v645, -inf
    %v648 = vmax.f32 %v640, %v646
    %v649 = vmax.f32 %v641, %v647
    %v650 = vmax.f32 %v648, %v634
    %v651 = vmax.f32 %v649, %v635
    %v652 = vsub.f32 %v548, %v650
    %v653 = vsub.f32 %v549, %v651
    %v654 = vmax.f32 %v652, 0.0
    %v655 = vmax.f32 %v653, 0.0
    %v656 = vmul.f32 %v592, %v654
    %v657 = vmul.f32 %v593, %v655
    %v658 = vsub.f32 %v654, %v656
    %v659 = vsub.f32 %v655, %v657
    %v660 = vmax.f32 %v658, 0.0
    %v661 = vmax.f32 %v659, 0.0
    %v662 = vadd.f32 %v592, %v660
    %v663 = vadd.f32 %v593, %v661
    %v664 = vmul.f32 %v44, %v46
    %v665 = vmul.f32 %v45, %v47
    %v666 = vadd.f32 %v664, %v665
    %v667 = vrot.slane %v666, 4
    %v668 = vadd.f32 %v666, %v667
    %v669 = vrot.slane %v668, 2
    %v670 = vadd.f32 %v668, %v669
    %v671 = vrot.slane %v670, 1
    %v672 = vadd.f32 %v670, %v671
    %673 = vst [vmem:[#allocation7] sm:$0x1] %v672
    %v674 = vadd.f32 %v44, %v45
    %v675 = vrot.slane %v674, 4
    %v676 = vadd.f32 %v674, %v675
    %v677 = vrot.slane %v676, 2
    %v678 = vadd.f32 %v676, %v677
    %v679 = vrot.slane %v678, 1
    %v680 = vadd.f32 %v678, %v679
    %681 = vst [vmem:[#allocation7 + $0x1] sm:$0x1] %v680
    %v682 = vadd.f32 %v46, %v47
    %v683 = vrot.slane %v682, 4
    %v684 = vadd.f32 %v682, %v683
    %v685 = vrot.slane %v684, 2
    %v686 = vadd.f32 %v684, %v685
    %v687 = vrot.slane %v686, 1
    %v688 = vadd.f32 %v686, %v687
    %689 = vst [vmem:[#allocation7 + $0x2] sm:$0x1] %v688
    %v690 = vmul.f32 %v382, %v44
    %v691 = vmul.f32 %v383, %v45
    %v692 = vadd.f32 %v690, %v691
    %v693 = vrot.slane %v692, 4
    %v694 = vadd.f32 %v692, %v693
    %v695 = vrot.slane %v694, 2
    %v696 = vadd.f32 %v694, %v695
    %v697 = vrot.slane %v696, 1
    %v698 = vadd.f32 %v696, %v697
    %699 = vst [vmem:[#allocation7 + $0x3] sm:$0x1] %v698
    %v700 = vadd.f32 %v382, %v383
    %v701 = vrot.slane %v700, 4
    %v702 = vadd.f32 %v700, %v701
    %v703 = vrot.slane %v702, 2
    %v704 = vadd.f32 %v702, %v703
    %v705 = vrot.slane %v704, 1
    %v706 = vadd.f32 %v704, %v705
    %707 = vst [vmem:[#allocation7 + $0x4] sm:$0x1] %v706
    %v708 = vmul.f32 %v662, %v46
    %v709 = vmul.f32 %v663, %v47
    %v710 = vadd.f32 %v708, %v709
    %v711 = vrot.slane %v710, 4
    %v712 = vadd.f32 %v710, %v711
    %v713 = vrot.slane %v712, 2
    %v714 = vadd.f32 %v712, %v713
    %v715 = vrot.slane %v714, 1
    %v716 = vadd.f32 %v714, %v715
    %717 = vst [vmem:[#allocation7 + $0x5] sm:$0x1] %v716
    %v718 = vadd.f32 %v662, %v663
    %v719 = vrot.slane %v718, 4
    %v720 = vadd.f32 %v718, %v719
    %v721 = vrot.slane %v720, 2
    %v722 = vadd.f32 %v720, %v721
    %v723 = vrot.slane %v722, 1
    %v724 = vadd.f32 %v722, %v723
    %725 = vst [vmem:[#allocation7 + $0x6] sm:$0x1] %v724
    %726 = vst [vmem:[#allocation7 + $0x7] sm:$0x1] 0.0
    // Predicated region
    $region18: #{tpu_custom_call.1} parent=1 // pred_check
      _
    $region19: #{tpu_custom_call.1} parent=1 // pred_check_branch
      %728 = sbr.rel (0) target = $region21
    $region20: #{tpu_custom_call.1} parent=1 // pred_region
      %730 = vsyncadd [#allocation4], 0
      %s732 = sshll.u32 [#allocation7], 4
      %s733 = int_to_ptr.vmem [resolvable:$true] %s732
      %s734 = sshll.u32 %s2, 4
      %s735 = int_to_ptr.hbm [resolvable:$true] %s734
      %737 = dma.vmem_to_hbm [thread:$0]  %s733, 128, %s735, [#allocation4]
    $region21: #{tpu_custom_call.1} parent=1 // pred_fallthru
      _
    // Predicated region
    $region22: #{tpu_custom_call.1} parent=1 // pred_check
      _
    $region23: #{tpu_custom_call.1} parent=1 // pred_check_branch
      %739 = sbr.rel (0) target = $region25
    $region24: #{tpu_custom_call.1} parent=1 // pred_region
      %741 = dma.done [#allocation4], 128
    $region25: #{tpu_custom_call.1} parent=1 // pred_fallthru
      _
    %742 = vsyncpa [#allocation3], 1
    %743 = vsyncpa [#allocation6], 1
    %744 = vsyncpa [#allocation4], 1

</llo_original>
